<compile_context>
chip_gen: v7x
topology: tpu7x:2x2x1
jax: 0.10.0
libtpu: 0.0.40
codegen_flags: <defaults>
</compile_context>

<pallas_src>
import jax
import jax.numpy as jnp
from jax import lax
from jax.experimental import pallas as pl
from jax.experimental.pallas import tpu as pltpu


# --------------------------------------------------------------------------
# Kernels
# --------------------------------------------------------------------------
def _make_fused_kernel(chunk, n_chunks):
    """Fused kernel: whole (C, L) bf16 slab per batch element stays resident,
    global pool computed in-kernel, f32 compute chunked over L."""
    multi = n_chunks > 1
    inv_l = 1.0 / float(chunk * n_chunks)

    def _load(ref, i):
        if multi:
            s = pl.multiple_of(i * chunk, 128)       # chunk % 128 == 0 here
            return ref[0, :, pl.ds(s, chunk)]
        return ref[0]

    def kernel(x_ref, r_ref,
               w1l_ref, b1l_ref, w2l_ref, b2l_ref,
               w1g_ref, b1g_ref, w2g_ref, b2g_ref,
               o_ref):
        C = x_ref.shape[1]

        # ---- pass 1: global average pool over L (f32 accumulate, chunked) ----
        def pool_body(i, acc):
            xa = (_load(x_ref, i).astype(jnp.float32)
                  + _load(r_ref, i).astype(jnp.float32))
            return acc + jnp.sum(xa, axis=1, keepdims=True)

        init = jnp.zeros((C, 1), jnp.float32)
        if multi:
            pool = lax.fori_loop(0, n_chunks, pool_body, init) * inv_l
        else:
            pool = pool_body(0, init) * inv_l

        # ---- global branch: tiny MLP on the pooled (C, 1) vector ----
        hg = jnp.maximum(
            jnp.dot(w1g_ref[...], pool, preferred_element_type=jnp.float32)
            + b1g_ref[...], 0.0)
        xg = jnp.dot(w2g_ref[...], hg,
                     preferred_element_type=jnp.float32) + b2g_ref[...]
        bias2 = b2l_ref[...] + xg        # fold xg into the 2nd-conv bias (C, 1)

        # ---- pass 2: local branch + blend, chunk by chunk (bounded f32 temps)
        def blend_body(i, carry):
            xs = _load(x_ref, i)
            rs = _load(r_ref, i)
            xa_bf = (xs + rs).astype(jnp.bfloat16)   # bf16 VPU add
            h = jnp.maximum(
                jnp.dot(w1l_ref[...], xa_bf, preferred_element_type=jnp.float32)
                + b1l_ref[...], 0.0)
            xl = jnp.dot(w2l_ref[...], h.astype(jnp.bfloat16),
                         preferred_element_type=jnp.float32) + bias2
            wei = jax.nn.sigmoid(xl)
            xf = xs.astype(jnp.float32)
            rf = rs.astype(jnp.float32)
            out = (2.0 * (rf + wei * (xf - rf))).astype(o_ref.dtype)
            if multi:
                s = pl.multiple_of(i * chunk, 128)
                o_ref[0, :, pl.ds(s, chunk)] = out
            else:
                o_ref[0] = out
            return carry

        if multi:
            lax.fori_loop(0, n_chunks, blend_body, 0)
        else:
            blend_body(0, 0)

    return kernel


def _asem_local_kernel(x_ref, r_ref, bias2_ref, w1l_ref, b1l_ref, w2l_ref, o_ref):
    """L-tiled path: global-branch result is pre-folded into bias2 (B, C, 1)."""
    xs = x_ref[0]                                   # (C, TL)
    rs = r_ref[0]
    xa_bf = (xs + rs).astype(jnp.bfloat16)          # bf16 VPU add (v6e/v7x native)
    h = jnp.maximum(
        jnp.dot(w1l_ref[...], xa_bf, preferred_element_type=jnp.float32)
        + b1l_ref[...], 0.0)
    xl = jnp.dot(w2l_ref[...], h.astype(jnp.bfloat16),
                 preferred_element_type=jnp.float32) + bias2_ref[0]
    wei = jax.nn.sigmoid(xl)
    xf = xs.astype(jnp.float32)
    rf = rs.astype(jnp.float32)
    o_ref[0] = (2.0 * (rf + wei * (xf - rf))).astype(o_ref.dtype)


# --------------------------------------------------------------------------
# VMEM / tiling heuristics (generation-aware)
# --------------------------------------------------------------------------
def _vmem_capacity_bytes():
    try:
        cap = getattr(pltpu.get_tpu_info(), "vmem_capacity_bytes", None)
        if cap:
            return int(cap)
    except Exception:
        pass
    return 64 * 1024 * 1024          # conservative default (v7x per-core VMEM)


def _choose_chunk(L, cap=512):
    """Largest multiple-of-128 divisor of L that is <= cap; else a single chunk."""
    if L % 128 == 0 and L > cap:
        hi = cap - cap % 128
        for cand in range(hi, 127, -128):
            if L % cand == 0:
                return cand, L // cand
    return L, 1


def _choose_l_tile(C, L, budget, l_cap):
    # ~36 B per (channel, lane): double-buffered bf16 x/res/out blocks + f32 temps.
    max_tl = max(128, (budget // (36 * C)) // 128 * 128)
    tl = min(l_cap, max_tl, max(128, pl.cdiv(L, 128) * 128))
    tl = max(128, tl - tl % 128)
    for cand in range(tl, 127, -128):    # prefer a tile that divides L exactly
        if L % cand == 0:
            return cand
    return tl                            # ragged last tile (masked store) otherwise


# --------------------------------------------------------------------------
# Wrappers
# --------------------------------------------------------------------------
def _asem_fused(x, residual, params, chunk, n_chunks, vmem_limit):
    B, C, L = x.shape
    (w1l, b1l), (w2l, b2l), (w1g, b1g), (w2g, b2g) = params

    def full(a):
        return pl.BlockSpec(a.shape, lambda b: (0,) * a.ndim)

    return pl.pallas_call(
        _make_fused_kernel(chunk, n_chunks),
        out_shape=jax.ShapeDtypeStruct((B, C, L), x.dtype),
        grid_spec=pltpu.PrefetchScalarGridSpec(
            num_scalar_prefetch=0,
            grid=(B,),
            in_specs=[
                pl.BlockSpec((1, C, L), lambda b: (b, 0, 0)),   # x
                pl.BlockSpec((1, C, L), lambda b: (b, 0, 0)),   # residual
                full(w1l), full(b1l), full(w2l), full(b2l),     # local branch
                full(w1g), full(b1g), full(w2g), full(b2g),     # global branch
            ],
            out_specs=pl.BlockSpec((1, C, L), lambda b: (b, 0, 0)),
        ),
        compiler_params=pltpu.CompilerParams(
            dimension_semantics=("parallel",),
            vmem_limit_bytes=vmem_limit),
    )(x, residual, w1l, b1l, w2l, b2l, w1g, b1g, w2g, b2g)


def _asem_tiled(x, residual, params, l_tile, budget, l_cap, vmem_limit):
    B, C, L = x.shape
    (w1l, b1l), (w2l, b2l), (w1g, b1g), (w2g, b2g) = params

    # Global branch hoisted to the wrapper.  Pool via dtype=f32 reductions so no
    # (B, C, L) f32 intermediate is ever materialized in HBM.
    pool = ((jnp.sum(x, axis=2, dtype=jnp.float32)
             + jnp.sum(residual, axis=2, dtype=jnp.float32)) * (1.0 / L))[..., None]
    hg = jnp.maximum(jnp.einsum('oc,bcl->bol', w1g, pool) + b1g[None], 0.0)
    xg = jnp.einsum('oc,bcl->bol', w2g, hg) + b2g[None]           # (B, C, 1) f32
    bias2 = b2l[None] + xg          # fold xg into the 2nd-conv bias per batch

    if l_tile is None:
        l_tile = _choose_l_tile(C, L, budget, l_cap)
    l_tile = max(128, (int(l_tile) // 128) * 128)
    n_lt = pl.cdiv(L, l_tile)       # ragged last tile handled by masked stores

    def full(a):
        return pl.BlockSpec(a.shape, lambda b, l: (0,) * a.ndim)

    return pl.pallas_call(
        _asem_local_kernel,
        out_shape=jax.ShapeDtypeStruct((B, C, L), x.dtype),
        grid_spec=pltpu.PrefetchScalarGridSpec(
            num_scalar_prefetch=0,
            grid=(B, n_lt),
            in_specs=[
                pl.BlockSpec((1, C, l_tile), lambda b, l: (b, 0, l)),   # x
                pl.BlockSpec((1, C, l_tile), lambda b, l: (b, 0, l)),   # residual
                pl.BlockSpec((1, C, 1),      lambda b, l: (b, 0, 0)),   # b2l + xg
                full(w1l), full(b1l), full(w2l),
            ],
            out_specs=pl.BlockSpec((1, C, l_tile), lambda b, l: (b, 0, l)),
        ),
        compiler_params=pltpu.CompilerParams(
            dimension_semantics=("parallel", "parallel"),
            vmem_limit_bytes=vmem_limit),
    )(x, residual, bias2, w1l, b1l, w2l)


def asem_forward(x, residual, params, *, l_tile=None, force_tiled=False):
    """ASEM forward.  Picks the fused (single HBM pass) or L-tiled path."""
    B, C, L = x.shape
    cap = _vmem_capacity_bytes()
    vmem_limit = int(cap * 0.85)
    budget = vmem_limit // 2          # headroom for double-buffering / compiler scratch
    l_cap = 2048 if cap >= (100 << 20) else 512   # v5e/v6e: big tiles; v7x (64 MiB): 512

    if not force_tiled and l_tile is None:
        chunk, n_chunks = _choose_chunk(L)
        itemsize = jnp.dtype(x.dtype).itemsize
        fused_bytes = (3 * 2 * C * L * itemsize    # x/res/out slabs (double-buffered)
                       + 28 * C * chunk            # per-chunk f32 intermediates
                       + (1 << 20))                # weights + misc
        # v7x has 2 TensorCores sharded over "parallel" grid axes; with B == 1 the
        # fused grid=(B,) leaves a core idle, so prefer the L-tiled grid there.
        cores_ok = (B >= 2) or (L <= 2 * 128)
        if fused_bytes <= budget and cores_ok:
            return _asem_fused(x, residual, params, chunk, n_chunks, vmem_limit)
    return _asem_tiled(x, residual, params, l_tile, budget, l_cap, vmem_limit)


# --------------------------------------------------------------------------
# Parameters (BN folded) and plain-JAX reference
# --------------------------------------------------------------------------
def _fold_bn(w, b, gamma, beta, mean, var, eps=1e-5):
    """Fold eval-mode BatchNorm1d into a preceding 1x1 conv (matmul + bias)."""
    s = gamma / jnp.sqrt(var + eps)
    return w * s[:, None], s * (b - mean) + beta


def make_params(key, channels, inter_channels):
    """Deterministic synthetic parameters; BN folded into conv weight/bias."""
    ks = jax.random.split(key, 16)

    def layer(kw, kb, kg, kbe, cout, cin):
        w = jax.random.normal(kw, (cout, cin), jnp.float32) * 0.1
        b = jax.random.normal(kb, (cout,), jnp.float32) * 0.1
        g = 1.0 + 0.05 * jax.random.normal(kg, (cout,), jnp.float32)
        be = 0.05 * jax.random.normal(kbe, (cout,), jnp.float32)
        m = jnp.zeros((cout,), jnp.float32)
        v = jnp.ones((cout,), jnp.float32)
        return _fold_bn(w, b, g, be, m, v)

    w1l, b1l = layer(ks[0], ks[1], ks[2], ks[3], inter_channels, channels)
    w2l, b2l = layer(ks[4], ks[5], ks[6], ks[7], channels, inter_channels)
    w1g, b1g = layer(ks[8], ks[9], ks[10], ks[11], inter_channels, channels)
    w2g, b2g = layer(ks[12], ks[13], ks[14], ks[15], channels, inter_channels)

    # local-branch weights feed the wide (C, L_tile) matmuls -> bf16 MXU operands;
    # biases stay f32; global-branch params are tiny -> keep f32.
    return ((w1l.astype(jnp.bfloat16), b1l[:, None]),
            (w2l.astype(jnp.bfloat16), b2l[:, None]),
            (w1g, b1g[:, None]),
            (w2g, b2g[:, None]))


def asem_reference(x, residual, params):
    """Plain-JAX f32 reference of the same (eval-mode-BN) forward pass."""
    (w1l, b1l), (w2l, b2l), (w1g, b1g), (w2g, b2g) = params
    xf = x.astype(jnp.float32)
    rf = residual.astype(jnp.float32)
    xa = xf + rf
    w1 = w1l.astype(jnp.float32)
    w2 = w2l.astype(jnp.float32)
    h = jnp.maximum(jnp.einsum('oc,bcl->bol', w1, xa) + b1l[None], 0.0)
    xl = jnp.einsum('oc,bcl->bol', w2, h) + b2l[None]
    xp = jnp.mean(xa, axis=2, keepdims=True)
    hg = jnp.maximum(jnp.einsum('oc,bcl->bol', w1g, xp) + b1g[None], 0.0)
    xg = jnp.einsum('oc,bcl->bol', w2g, hg) + b2g[None]
    wei = jax.nn.sigmoid(xl + xg)
    return 2.0 * xf * wei + 2.0 * rf * (1.0 - wei)


if __name__ == "__main__":
    B, C, L, r = 2, 64, 256, 4
    Ci = C // r

    key = jax.random.PRNGKey(0)
    kx, kr, kp = jax.random.split(key, 3)
    x = jax.random.normal(kx, (B, C, L), jnp.float32).astype(jnp.bfloat16)
    residual = jax.random.normal(kr, (B, C, L), jnp.float32).astype(jnp.bfloat16)
    params = make_params(kp, C, Ci)

    # fused path (single-chunk, auto-selected for this small shape)
    out_fused = jax.block_until_ready(asem_forward(x, residual, params))
    # tiled path (hoisted global branch, grid = (B, L/TL) = (2, 2))
    out_tiled = jax.block_until_ready(
        asem_forward(x, residual, params, force_tiled=True, l_tile=128))

    ref = asem_reference(x, residual, params)
    assert out_fused.shape == (B, C, L) and out_fused.dtype == x.dtype
    assert out_tiled.shape == (B, C, L) and out_tiled.dtype == x.dtype
    assert bool(jnp.allclose(out_fused.astype(jnp.float32), ref,
                             atol=5e-2, rtol=5e-2)), "fused-path mismatch"
    assert bool(jnp.allclose(out_tiled.astype(jnp.float32), ref,
                             atol=5e-2, rtol=5e-2)), "tiled-path mismatch"

    # exercise the in-kernel chunked fused path (n_chunks > 1) and the
    # auto-sized tiled path at a second small shape
    L2 = 1024
    x2 = jax.random.normal(jax.random.PRNGKey(1), (B, C, L2),
                           jnp.float32).astype(jnp.bfloat16)
    r2 = jax.random.normal(jax.random.PRNGKey(2), (B, C, L2),
                           jnp.float32).astype(jnp.bfloat16)
    out2_f = jax.block_until_ready(asem_forward(x2, r2, params))      # 2 chunks
    out2_t = jax.block_until_ready(asem_forward(x2, r2, params, force_tiled=True))
    ref2 = asem_reference(x2, r2, params)
    assert bool(jnp.allclose(out2_f.astype(jnp.float32), ref2,
                             atol=5e-2, rtol=5e-2)), "chunked fused-path mismatch"
    assert bool(jnp.allclose(out2_t.astype(jnp.float32), ref2,
                             atol=5e-2, rtol=5e-2)), "auto-tiled-path mismatch"

    print("KERNEL_OK")
</pallas_src>

<mosaic_0001>
module attributes {stable_mosaic.version = 11 : i64} {
  func.func @kernel(%arg0: i32, %arg1: memref<1x64x256xbf16, #tpu.memory_space<vmem>>, %arg2: memref<1x64x256xbf16, #tpu.memory_space<vmem>>, %arg3: memref<16x64xbf16, #tpu.memory_space<vmem>>, %arg4: memref<16x1xf32, #tpu.memory_space<vmem>>, %arg5: memref<64x16xbf16, #tpu.memory_space<vmem>>, %arg6: memref<64x1xf32, #tpu.memory_space<vmem>>, %arg7: memref<16x64xf32, #tpu.memory_space<vmem>>, %arg8: memref<16x1xf32, #tpu.memory_space<vmem>>, %arg9: memref<64x16xf32, #tpu.memory_space<vmem>>, %arg10: memref<64x1xf32, #tpu.memory_space<vmem>>, %arg11: memref<1x64x256xbf16, #tpu.memory_space<vmem>>) attributes {dimension_semantics = [#tpu.dimension_semantics<parallel>], iteration_bounds = array<i64: 2>, scalar_prefetch = 0 : i64, scratch_operands = 0 : i64, tpu.core_type = #tpu.core_type<tc>, window_params = [{transform_indices = @transform_0, window_bounds = array<i64: 1, 64, 256>}, {transform_indices = @transform_1, window_bounds = array<i64: 1, 64, 256>}, {pipeline_mode = #tpu.pipeline_mode<synchronous>, transform_indices = @transform_2, window_bounds = array<i64: 16, 64>}, {pipeline_mode = #tpu.pipeline_mode<synchronous>, transform_indices = @transform_3, window_bounds = array<i64: 16, 1>}, {pipeline_mode = #tpu.pipeline_mode<synchronous>, transform_indices = @transform_4, window_bounds = array<i64: 64, 16>}, {pipeline_mode = #tpu.pipeline_mode<synchronous>, transform_indices = @transform_5, window_bounds = array<i64: 64, 1>}, {pipeline_mode = #tpu.pipeline_mode<synchronous>, transform_indices = @transform_6, window_bounds = array<i64: 16, 64>}, {pipeline_mode = #tpu.pipeline_mode<synchronous>, transform_indices = @transform_7, window_bounds = array<i64: 16, 1>}, {pipeline_mode = #tpu.pipeline_mode<synchronous>, transform_indices = @transform_8, window_bounds = array<i64: 64, 16>}, {pipeline_mode = #tpu.pipeline_mode<synchronous>, transform_indices = @transform_9, window_bounds = array<i64: 64, 1>}, {transform_indices = @transform_10, window_bounds = array<i64: 1, 64, 256>}]} {
    %cst = arith.constant 0.000000e+00 : f32
    %0 = vector.broadcast %cst : f32 to vector<64x1xf32>
    %c0 = arith.constant 0 : index
    %c0_0 = arith.constant 0 : index
    %c0_1 = arith.constant 0 : index
    %1 = vector.load %arg1[%c0, %c0_0, %c0_1] : memref<1x64x256xbf16, #tpu.memory_space<vmem>>, vector<1x64x256xbf16>
    %2 = vector.shape_cast %1 : vector<1x64x256xbf16> to vector<64x256xbf16>
    %3 = arith.extf %2 : vector<64x256xbf16> to vector<64x256xf32>
    %c0_2 = arith.constant 0 : index
    %c0_3 = arith.constant 0 : index
    %c0_4 = arith.constant 0 : index
    %4 = vector.load %arg2[%c0_2, %c0_3, %c0_4] : memref<1x64x256xbf16, #tpu.memory_space<vmem>>, vector<1x64x256xbf16>
    %5 = vector.shape_cast %4 : vector<1x64x256xbf16> to vector<64x256xbf16>
    %6 = arith.extf %5 : vector<64x256xbf16> to vector<64x256xf32>
    %7 = arith.addf %3, %6 : vector<64x256xf32>
    %cst_5 = arith.constant dense<0.000000e+00> : vector<64xf32>
    %8 = vector.multi_reduction <add>, %7, %cst_5 [1] : vector<64x256xf32> to vector<64xf32>
    %9 = vector.shape_cast %8 : vector<64xf32> to vector<64x1xf32>
    %10 = arith.addf %0, %9 : vector<64x1xf32>
    %cst_6 = arith.constant 3.906250e-03 : f32
    %11 = vector.broadcast %cst_6 : f32 to vector<64x1xf32>
    %12 = arith.mulf %10, %11 : vector<64x1xf32>
    %c0_7 = arith.constant 0 : index
    %c0_8 = arith.constant 0 : index
    %13 = vector.load %arg7[%c0_7, %c0_8] : memref<16x64xf32, #tpu.memory_space<vmem>>, vector<16x64xf32>
    %cst_9 = arith.constant dense<0.000000e+00> : vector<16x1xf32>
    %14 = tpu.matmul %13, %12, %cst_9 {dimension_numbers = #tpu.dot_dimension_numbers<[1], [0], [0], [1], [0, 0, 1, 1], [], []>} : vector<16x64xf32>, vector<64x1xf32>, vector<16x1xf32> -> vector<16x1xf32>
    %c0_10 = arith.constant 0 : index
    %c0_11 = arith.constant 0 : index
    %15 = vector.load %arg8[%c0_10, %c0_11] : memref<16x1xf32, #tpu.memory_space<vmem>>, vector<16x1xf32>
    %16 = arith.addf %14, %15 : vector<16x1xf32>
    %cst_12 = arith.constant 0.000000e+00 : f32
    %17 = vector.broadcast %cst_12 : f32 to vector<16x1xf32>
    %18 = arith.maximumf %16, %17 : vector<16x1xf32>
    %c0_13 = arith.constant 0 : index
    %c0_14 = arith.constant 0 : index
    %19 = vector.load %arg9[%c0_13, %c0_14] : memref<64x16xf32, #tpu.memory_space<vmem>>, vector<64x16xf32>
    %cst_15 = arith.constant dense<0.000000e+00> : vector<64x1xf32>
    %20 = tpu.matmul %19, %18, %cst_15 {dimension_numbers = #tpu.dot_dimension_numbers<[1], [0], [0], [1], [0, 0, 1, 1], [], []>} : vector<64x16xf32>, vector<16x1xf32>, vector<64x1xf32> -> vector<64x1xf32>
    %c0_16 = arith.constant 0 : index
    %c0_17 = arith.constant 0 : index
    %21 = vector.load %arg10[%c0_16, %c0_17] : memref<64x1xf32, #tpu.memory_space<vmem>>, vector<64x1xf32>
    %22 = arith.addf %20, %21 : vector<64x1xf32>
    %c0_18 = arith.constant 0 : index
    %c0_19 = arith.constant 0 : index
    %23 = vector.load %arg6[%c0_18, %c0_19] : memref<64x1xf32, #tpu.memory_space<vmem>>, vector<64x1xf32>
    %24 = arith.addf %23, %22 : vector<64x1xf32>
    %c0_20 = arith.constant 0 : index
    %c0_21 = arith.constant 0 : index
    %c0_22 = arith.constant 0 : index
    %25 = vector.load %arg1[%c0_20, %c0_21, %c0_22] : memref<1x64x256xbf16, #tpu.memory_space<vmem>>, vector<1x64x256xbf16>
    %26 = vector.shape_cast %25 : vector<1x64x256xbf16> to vector<64x256xbf16>
    %c0_23 = arith.constant 0 : index
    %c0_24 = arith.constant 0 : index
    %c0_25 = arith.constant 0 : index
    %27 = vector.load %arg2[%c0_23, %c0_24, %c0_25] : memref<1x64x256xbf16, #tpu.memory_space<vmem>>, vector<1x64x256xbf16>
    %28 = vector.shape_cast %27 : vector<1x64x256xbf16> to vector<64x256xbf16>
    %29 = arith.addf %26, %28 : vector<64x256xbf16>
    %c0_26 = arith.constant 0 : index
    %c0_27 = arith.constant 0 : index
    %30 = vector.load %arg3[%c0_26, %c0_27] : memref<16x64xbf16, #tpu.memory_space<vmem>>, vector<16x64xbf16>
    %cst_28 = arith.constant dense<0.000000e+00> : vector<16x256xf32>
    %31 = tpu.matmul %30, %29, %cst_28 {dimension_numbers = #tpu.dot_dimension_numbers<[1], [0], [0], [1], [0, 0, 1, 1], [], []>} : vector<16x64xbf16>, vector<64x256xbf16>, vector<16x256xf32> -> vector<16x256xf32>
    %c0_29 = arith.constant 0 : index
    %c0_30 = arith.constant 0 : index
    %32 = vector.load %arg4[%c0_29, %c0_30] : memref<16x1xf32, #tpu.memory_space<vmem>>, vector<16x1xf32>
    %33 = vector.broadcast %32 : vector<16x1xf32> to vector<16x256xf32>
    %34 = arith.addf %31, %33 : vector<16x256xf32>
    %cst_31 = arith.constant 0.000000e+00 : f32
    %35 = vector.broadcast %cst_31 : f32 to vector<16x256xf32>
    %36 = arith.maximumf %34, %35 : vector<16x256xf32>
    %c0_32 = arith.constant 0 : index
    %c0_33 = arith.constant 0 : index
    %37 = vector.load %arg5[%c0_32, %c0_33] : memref<64x16xbf16, #tpu.memory_space<vmem>>, vector<64x16xbf16>
    %38 = arith.truncf %36 : vector<16x256xf32> to vector<16x256xbf16>
    %cst_34 = arith.constant dense<0.000000e+00> : vector<64x256xf32>
    %39 = tpu.matmul %37, %38, %cst_34 {dimension_numbers = #tpu.dot_dimension_numbers<[1], [0], [0], [1], [0, 0, 1, 1], [], []>} : vector<64x16xbf16>, vector<16x256xbf16>, vector<64x256xf32> -> vector<64x256xf32>
    %40 = vector.broadcast %24 : vector<64x1xf32> to vector<64x256xf32>
    %41 = arith.addf %39, %40 : vector<64x256xf32>
    %42 = arith.negf %41 : vector<64x256xf32>
    %43 = math.exp %42 : vector<64x256xf32>
    %cst_35 = arith.constant 1.000000e+00 : f32
    %44 = vector.broadcast %cst_35 : f32 to vector<64x256xf32>
    %45 = arith.addf %44, %43 : vector<64x256xf32>
    %46 = arith.divf %44, %45 : vector<64x256xf32>
    %47 = arith.extf %26 : vector<64x256xbf16> to vector<64x256xf32>
    %48 = arith.extf %28 : vector<64x256xbf16> to vector<64x256xf32>
    %49 = arith.subf %47, %48 : vector<64x256xf32>
    %50 = arith.mulf %46, %49 : vector<64x256xf32>
    %51 = arith.addf %48, %50 : vector<64x256xf32>
    %cst_36 = arith.constant 2.000000e+00 : f32
    %52 = vector.broadcast %cst_36 : f32 to vector<64x256xf32>
    %53 = arith.mulf %52, %51 : vector<64x256xf32>
    %54 = arith.truncf %53 : vector<64x256xf32> to vector<64x256xbf16>
    %c0_37 = arith.constant 0 : index
    %c0_38 = arith.constant 0 : index
    %c0_39 = arith.constant 0 : index
    %55 = vector.load %arg11[%c0_37, %c0_38, %c0_39] : memref<1x64x256xbf16, #tpu.memory_space<vmem>>, vector<1x64x256xbf16>
    %56 = vector.shape_cast %55 : vector<1x64x256xbf16> to vector<64x256xbf16>
    %57 = vector.shape_cast %54 : vector<64x256xbf16> to vector<1x64x256xbf16>
    tpu.vector_store %arg11[%c0_37, %c0_38, %c0_39], %57 {strides = array<i32>} : memref<1x64x256xbf16, #tpu.memory_space<vmem>>, vector<1x64x256xbf16>,
    return
  }
  func.func @transform_0(%arg0: i32) -> (i32, i32, i32) {
    %c0_i32 = arith.constant 0 : i32
    %c0_i32_0 = arith.constant 0 : i32
    %c0_i32_1 = arith.constant 0 : i32
    return %arg0, %c0_i32, %c0_i32_0 : i32, i32, i32
  }
  func.func @transform_1(%arg0: i32) -> (i32, i32, i32) {
    %c0_i32 = arith.constant 0 : i32
    %c0_i32_0 = arith.constant 0 : i32
    %c0_i32_1 = arith.constant 0 : i32
    return %arg0, %c0_i32, %c0_i32_0 : i32, i32, i32
  }
  func.func @transform_2(%arg0: i32) -> (i32, i32) {
    %c0_i32 = arith.constant 0 : i32
    %c0_i32_0 = arith.constant 0 : i32
    %c0_i32_1 = arith.constant 0 : i32
    return %c0_i32, %c0_i32_0 : i32, i32
  }
  func.func @transform_3(%arg0: i32) -> (i32, i32) {
    %c0_i32 = arith.constant 0 : i32
    %c0_i32_0 = arith.constant 0 : i32
    %c0_i32_1 = arith.constant 0 : i32
    return %c0_i32, %c0_i32_0 : i32, i32
  }
  func.func @transform_4(%arg0: i32) -> (i32, i32) {
    %c0_i32 = arith.constant 0 : i32
    %c0_i32_0 = arith.constant 0 : i32
    %c0_i32_1 = arith.constant 0 : i32
    return %c0_i32, %c0_i32_0 : i32, i32
  }
  func.func @transform_5(%arg0: i32) -> (i32, i32) {
    %c0_i32 = arith.constant 0 : i32
    %c0_i32_0 = arith.constant 0 : i32
    %c0_i32_1 = arith.constant 0 : i32
    return %c0_i32, %c0_i32_0 : i32, i32
  }
  func.func @transform_6(%arg0: i32) -> (i32, i32) {
    %c0_i32 = arith.constant 0 : i32
    %c0_i32_0 = arith.constant 0 : i32
    %c0_i32_1 = arith.constant 0 : i32
    return %c0_i32, %c0_i32_0 : i32, i32
  }
  func.func @transform_7(%arg0: i32) -> (i32, i32) {
    %c0_i32 = arith.constant 0 : i32
    %c0_i32_0 = arith.constant 0 : i32
    %c0_i32_1 = arith.constant 0 : i32
    return %c0_i32, %c0_i32_0 : i32, i32
  }
  func.func @transform_8(%arg0: i32) -> (i32, i32) {
    %c0_i32 = arith.constant 0 : i32
    %c0_i32_0 = arith.constant 0 : i32
    %c0_i32_1 = arith.constant 0 : i32
    return %c0_i32, %c0_i32_0 : i32, i32
  }
  func.func @transform_9(%arg0: i32) -> (i32, i32) {
    %c0_i32 = arith.constant 0 : i32
    %c0_i32_0 = arith.constant 0 : i32
    %c0_i32_1 = arith.constant 0 : i32
    return %c0_i32, %c0_i32_0 : i32, i32
  }
  func.func @transform_10(%arg0: i32) -> (i32, i32, i32) {
    %c0_i32 = arith.constant 0 : i32
    %c0_i32_0 = arith.constant 0 : i32
    %c0_i32_1 = arith.constant 0 : i32
    return %arg0, %c0_i32, %c0_i32_0 : i32, i32, i32
  }
}

</mosaic_0001>

<llo_original>
// kernel: tpu_custom_call.1
$region0: #{tpu_custom_call.1}
  #allocation0 [shape = 'u32[]', space=smem, size = 0x4, offset = 0x4, fixed_abs, tag = 'smem constant byte address 0x4 - core index']
  #allocation1 [shape = 'u32[144,128]{1,0:T(1,128)}', space=vmem, size = 0x12000, scoped, tag = 'internal scratch']
  %s0 = inlined_call_operand.vmem [shape: bf16[2,64,256], index: 0, kind: input, shape index: {}]
  %s1 = inlined_call_operand.vmem [shape: bf16[2,64,256], index: 1, kind: input, shape index: {}]
  %s2 = inlined_call_operand.hbm [shape: bf16[16,64], index: 2, kind: input, shape index: {}]
  %s3 = inlined_call_operand.vmem [shape: f32[16,1], index: 3, kind: input, shape index: {}]
  %s4 = inlined_call_operand.vmem [shape: bf16[64,16], index: 4, kind: input, shape index: {}]
  %s5 = inlined_call_operand.vmem [shape: f32[64,1], index: 5, kind: input, shape index: {}]
  %s6 = inlined_call_operand.vmem [shape: f32[16,64], index: 6, kind: input, shape index: {}]
  %s7 = inlined_call_operand.vmem [shape: f32[16,1], index: 7, kind: input, shape index: {}]
  %s8 = inlined_call_operand.vmem [shape: f32[64,16], index: 8, kind: input, shape index: {}]
  %s9 = inlined_call_operand.vmem [shape: f32[64,1], index: 9, kind: input, shape index: {}]
  %s10 = inlined_call_operand.hbm [shape: bf16[2,64,256], index: 10, kind: output, shape index: {}]
  %s11 = sld [smem:[#allocation0]]
  $region77: #{tpu_custom_call.1} parent=0
    _
  %s13 = ssub.s32 1, %s11
  %s14 = scalar_select 0, %s13, %s11
  $region1: #{tpu_custom_call.1} parent=0
    #allocation2 [shape = 'u8[4096]{0}', space=vmem, size = 0x1000, scoped, tag = 'input window, operand 2, single buffered']
    #allocation3 [shape = 's32[2]{0}', space=sflag, size = 0x8, scoped, tag = 'scoped memory for tpu_custom_call.1']
    #allocation4 [shape = 's32[2]{0}', space=sflag, size = 0x8, scoped, tag = 'scoped memory for tpu_custom_call.1']
    #allocation5 [shape = 'u8[65536]{0}', space=vmem, size = 0x10000, scoped, tag = 'output window, operand 0']
    %15 = vsyncpa [#allocation3], 0
    %16 = vsyncpa [#allocation4], 0
    %s17 = scalar_lea.sflag [#allocation4], 1
    %18 = vsyncpa %s17, 0
    loop: start=0, step=1, limit=4
    $region2: #{tpu_custom_call.1} parent=1 // loop_pre_header
      _
    $region3: #{tpu_custom_call.1} parent=1 // loop_header
      %s20 = sphi 0, %s24
      %p21 = scmp.ge.s32.totalorder %s20, 4
      %s30 = sphi 0, %s32
      %s33 = sphi 0, %s30
      %s34 = sphi 0, %s33
      %s50 = sphi 0, %s34
      %s56 = sphi 0, %s58
      %s59 = sphi 0, %s56
      %s60 = sphi 0, %s59
      %s76 = sphi 0, %s60
      %s80 = sphi 0, %s80
      %s82 = sphi 0, %s80
      %s83 = sphi 0, %s82
      %s97 = sphi 0, %s83
      %s101 = sphi 0, %s101
      %s103 = sphi 0, %s101
      %s104 = sphi 0, %s103
      %s118 = sphi 0, %s104
      %s122 = sphi 0, %s122
      %s124 = sphi 0, %s122
      %s125 = sphi 0, %s124
      %s139 = sphi 0, %s125
      %s143 = sphi 0, %s143
      %s145 = sphi 0, %s143
      %s146 = sphi 0, %s145
      %s160 = sphi 0, %s146
      %s164 = sphi 0, %s164
      %s166 = sphi 0, %s164
      %s167 = sphi 0, %s166
      %s181 = sphi 0, %s167
      %s185 = sphi 0, %s185
      %s187 = sphi 0, %s185
      %s188 = sphi 0, %s187
      %s202 = sphi 0, %s188
      %s206 = sphi 0, %s206
      %s208 = sphi 0, %s206
      %s209 = sphi 0, %s208
      %s223 = sphi 0, %s209
      %s227 = sphi 0, %s227
      %s229 = sphi 0, %s227
      %s230 = sphi 0, %s229
      %s244 = sphi 0, %s230
      %s250 = sphi 0, %s252
      %s253 = sphi 0, %s250
      %s254 = sphi 0, %s253
      %s270 = sphi 0, %s254
    $region4: #{tpu_custom_call.1} parent=1 // loop_header_branch
      %23 = sbr.rel (%p21) target = $region8
    $region5: #{tpu_custom_call.1} parent=1 // loop_body
      %s25 = ssub.s32 %s20, 1
      %s26 = ssub.s32 %s20, 2
      %s27 = sadd.s32 %s20, 1
      %s28 = ssub.s32 %s20, %s27
      %p29 = scmp.eq.s32.totalorder %s28, 0
      %s31 = sadd.s32 %s30, 1
      %s32 = scalar_select %p29, %s30, %s31
      %p35 = pneg %p29
      %p36 = scmp.eq.s32.totalorder %s20, 1
      %p37 = por %p35, %p36
      %p38 = scmp.ne.s32.totalorder %s30, %s33
      %p39 = scmp.eq.s32.totalorder %s20, 0
      %p40 = por %p38, %p39
      %p41 = scmp.ne.s32.totalorder %s30, %s33
      %p42 = scmp.eq.s32.totalorder %s25, 1
      %p43 = por %p41, %p42
      %p44 = scmp.ne.s32.totalorder %s33, %s34
      %p45 = scmp.eq.s32.totalorder %s25, 0
      %p46 = por %p44, %p45
      %p47 = scmp.ne.s32.totalorder %s33, %s34
      %p48 = scmp.eq.s32.totalorder %s26, 1
      %p49 = por %p47, %p48
      %p51 = scmp.ne.s32.totalorder %s34, %s50
      %p52 = scmp.eq.s32.totalorder %s26, 0
      %p53 = por %p51, %p52
      %s54 = ssub.s32 %s20, %s27
      %p55 = scmp.eq.s32.totalorder %s54, 0
      %s57 = sadd.s32 %s56, 1
      %s58 = scalar_select %p55, %s56, %s57
      %p61 = pneg %p55
      %p62 = scmp.eq.s32.totalorder %s20, 1
      %p63 = por %p61, %p62
      %p64 = scmp.ne.s32.totalorder %s56, %s59
      %p65 = scmp.eq.s32.totalorder %s20, 0
      %p66 = por %p64, %p65
      %p67 = scmp.ne.s32.totalorder %s56, %s59
      %p68 = scmp.eq.s32.totalorder %s25, 1
      %p69 = por %p67, %p68
      %p70 = scmp.ne.s32.totalorder %s59, %s60
      %p71 = scmp.eq.s32.totalorder %s25, 0
      %p72 = por %p70, %p71
      %p73 = scmp.ne.s32.totalorder %s59, %s60
      %p74 = scmp.eq.s32.totalorder %s26, 1
      %p75 = por %p73, %p74
      %p77 = scmp.ne.s32.totalorder %s60, %s76
      %p78 = scmp.eq.s32.totalorder %s26, 0
      %p79 = por %p77, %p78
      %s81 = sadd.s32 %s80, 1
      %p84 = scmp.eq.s32.totalorder %s20, 1
      %p85 = scmp.ne.s32.totalorder %s80, %s82
      %p86 = scmp.eq.s32.totalorder %s20, 0
      %p87 = por %p85, %p86
      %p88 = scmp.ne.s32.totalorder %s80, %s82
      %p89 = scmp.eq.s32.totalorder %s25, 1
      %p90 = por %p88, %p89
      %p91 = scmp.ne.s32.totalorder %s82, %s83
      %p92 = scmp.eq.s32.totalorder %s25, 0
      %p93 = por %p91, %p92
      %p94 = scmp.ne.s32.totalorder %s82, %s83
      %p95 = scmp.eq.s32.totalorder %s26, 1
      %p96 = por %p94, %p95
      %p98 = scmp.ne.s32.totalorder %s83, %s97
      %p99 = scmp.eq.s32.totalorder %s26, 0
      %p100 = por %p98, %p99
      %s102 = sadd.s32 %s101, 1
      %p105 = scmp.eq.s32.totalorder %s20, 1
      %p106 = scmp.ne.s32.totalorder %s101, %s103
      %p107 = scmp.eq.s32.totalorder %s20, 0
      %p108 = por %p106, %p107
      %p109 = scmp.ne.s32.totalorder %s101, %s103
      %p110 = scmp.eq.s32.totalorder %s25, 1
      %p111 = por %p109, %p110
      %p112 = scmp.ne.s32.totalorder %s103, %s104
      %p113 = scmp.eq.s32.totalorder %s25, 0
      %p114 = por %p112, %p113
      %p115 = scmp.ne.s32.totalorder %s103, %s104
      %p116 = scmp.eq.s32.totalorder %s26, 1
      %p117 = por %p115, %p116
      %p119 = scmp.ne.s32.totalorder %s104, %s118
      %p120 = scmp.eq.s32.totalorder %s26, 0
      %p121 = por %p119, %p120
      %s123 = sadd.s32 %s122, 1
      %p126 = scmp.eq.s32.totalorder %s20, 1
      %p127 = scmp.ne.s32.totalorder %s122, %s124
      %p128 = scmp.eq.s32.totalorder %s20, 0
      %p129 = por %p127, %p128
      %p130 = scmp.ne.s32.totalorder %s122, %s124
      %p131 = scmp.eq.s32.totalorder %s25, 1
      %p132 = por %p130, %p131
      %p133 = scmp.ne.s32.totalorder %s124, %s125
      %p134 = scmp.eq.s32.totalorder %s25, 0
      %p135 = por %p133, %p134
      %p136 = scmp.ne.s32.totalorder %s124, %s125
      %p137 = scmp.eq.s32.totalorder %s26, 1
      %p138 = por %p136, %p137
      %p140 = scmp.ne.s32.totalorder %s125, %s139
      %p141 = scmp.eq.s32.totalorder %s26, 0
      %p142 = por %p140, %p141
      %s144 = sadd.s32 %s143, 1
      %p147 = scmp.eq.s32.totalorder %s20, 1
      %p148 = scmp.ne.s32.totalorder %s143, %s145
      %p149 = scmp.eq.s32.totalorder %s20, 0
      %p150 = por %p148, %p149
      %p151 = scmp.ne.s32.totalorder %s143, %s145
      %p152 = scmp.eq.s32.totalorder %s25, 1
      %p153 = por %p151, %p152
      %p154 = scmp.ne.s32.totalorder %s145, %s146
      %p155 = scmp.eq.s32.totalorder %s25, 0
      %p156 = por %p154, %p155
      %p157 = scmp.ne.s32.totalorder %s145, %s146
      %p158 = scmp.eq.s32.totalorder %s26, 1
      %p159 = por %p157, %p158
      %p161 = scmp.ne.s32.totalorder %s146, %s160
      %p162 = scmp.eq.s32.totalorder %s26, 0
      %p163 = por %p161, %p162
      %s165 = sadd.s32 %s164, 1
      %p168 = scmp.eq.s32.totalorder %s20, 1
      %p169 = scmp.ne.s32.totalorder %s164, %s166
      %p170 = scmp.eq.s32.totalorder %s20, 0
      %p171 = por %p169, %p170
      %p172 = scmp.ne.s32.totalorder %s164, %s166
      %p173 = scmp.eq.s32.totalorder %s25, 1
      %p174 = por %p172, %p173
      %p175 = scmp.ne.s32.totalorder %s166, %s167
      %p176 = scmp.eq.s32.totalorder %s25, 0
      %p177 = por %p175, %p176
      %p178 = scmp.ne.s32.totalorder %s166, %s167
      %p179 = scmp.eq.s32.totalorder %s26, 1
      %p180 = por %p178, %p179
      %p182 = scmp.ne.s32.totalorder %s167, %s181
      %p183 = scmp.eq.s32.totalorder %s26, 0
      %p184 = por %p182, %p183
      %s186 = sadd.s32 %s185, 1
      %p189 = scmp.eq.s32.totalorder %s20, 1
      %p190 = scmp.ne.s32.totalorder %s185, %s187
      %p191 = scmp.eq.s32.totalorder %s20, 0
      %p192 = por %p190, %p191
      %p193 = scmp.ne.s32.totalorder %s185, %s187
      %p194 = scmp.eq.s32.totalorder %s25, 1
      %p195 = por %p193, %p194
      %p196 = scmp.ne.s32.totalorder %s187, %s188
      %p197 = scmp.eq.s32.totalorder %s25, 0
      %p198 = por %p196, %p197
      %p199 = scmp.ne.s32.totalorder %s187, %s188
      %p200 = scmp.eq.s32.totalorder %s26, 1
      %p201 = por %p199, %p200
      %p203 = scmp.ne.s32.totalorder %s188, %s202
      %p204 = scmp.eq.s32.totalorder %s26, 0
      %p205 = por %p203, %p204
      %s207 = sadd.s32 %s206, 1
      %p210 = scmp.eq.s32.totalorder %s20, 1
      %p211 = scmp.ne.s32.totalorder %s206, %s208
      %p212 = scmp.eq.s32.totalorder %s20, 0
      %p213 = por %p211, %p212
      %p214 = scmp.ne.s32.totalorder %s206, %s208
      %p215 = scmp.eq.s32.totalorder %s25, 1
      %p216 = por %p214, %p215
      %p217 = scmp.ne.s32.totalorder %s208, %s209
      %p218 = scmp.eq.s32.totalorder %s25, 0
      %p219 = por %p217, %p218
      %p220 = scmp.ne.s32.totalorder %s208, %s209
      %p221 = scmp.eq.s32.totalorder %s26, 1
      %p222 = por %p220, %p221
      %p224 = scmp.ne.s32.totalorder %s209, %s223
      %p225 = scmp.eq.s32.totalorder %s26, 0
      %p226 = por %p224, %p225
      %s228 = sadd.s32 %s227, 1
      %p231 = scmp.eq.s32.totalorder %s20, 1
      %p232 = scmp.ne.s32.totalorder %s227, %s229
      %p233 = scmp.eq.s32.totalorder %s20, 0
      %p234 = por %p232, %p233
      %p235 = scmp.ne.s32.totalorder %s227, %s229
      %p236 = scmp.eq.s32.totalorder %s25, 1
      %p237 = por %p235, %p236
      %p238 = scmp.ne.s32.totalorder %s229, %s230
      %p239 = scmp.eq.s32.totalorder %s25, 0
      %p240 = por %p238, %p239
      %p241 = scmp.ne.s32.totalorder %s229, %s230
      %p242 = scmp.eq.s32.totalorder %s26, 1
      %p243 = por %p241, %p242
      %p245 = scmp.ne.s32.totalorder %s230, %s244
      %p246 = scmp.eq.s32.totalorder %s26, 0
      %p247 = por %p245, %p246
      %s248 = ssub.s32 %s20, %s27
      %p249 = scmp.eq.s32.totalorder %s248, 0
      %s251 = sadd.s32 %s250, 1
      %s252 = scalar_select %p249, %s250, %s251
      %p255 = pneg %p249
      %p256 = scmp.eq.s32.totalorder %s20, 1
      %p257 = por %p255, %p256
      %p258 = scmp.ne.s32.totalorder %s250, %s253
      %p259 = scmp.eq.s32.totalorder %s20, 0
      %p260 = por %p258, %p259
      %p261 = scmp.ne.s32.totalorder %s250, %s253
      %p262 = scmp.eq.s32.totalorder %s25, 1
      %p263 = por %p261, %p262
      %p264 = scmp.ne.s32.totalorder %s253, %s254
      %p265 = scmp.eq.s32.totalorder %s25, 0
      %p266 = por %p264, %p265
      %p267 = scmp.ne.s32.totalorder %s253, %s254
      %p268 = scmp.eq.s32.totalorder %s26, 1
      %p269 = por %p267, %p268
      %p271 = scmp.ne.s32.totalorder %s254, %s270
      %p272 = scmp.eq.s32.totalorder %s26, 0
      %p273 = por %p271, %p272
      %p274 = scmp.le.s32.totalorder 1, %s20
      %p275 = scmp.lt.s32.totalorder %s20, 3
      %p276 = pnand %p274, %p275
      %p277 = pneg %p276
      // Predicated region
      $region9: #{tpu_custom_call.1} parent=5 // pred_check
        _
      $region10: #{tpu_custom_call.1} parent=5 // pred_check_branch
        %279 = sbr.rel (%p276) target = $region12
      $region11: #{tpu_custom_call.1} parent=5 // pred_region
        %s280 = ssub.s32 %s20, 1
        // Predicated region
        $region13: #{tpu_custom_call.1} parent=11 // pred_check
          %p281 = pneg %p93
        $region14: #{tpu_custom_call.1} parent=11 // pred_check_branch
          %283 = sbr.rel (%p281) target = $region16
        $region15: #{tpu_custom_call.1} parent=11 // pred_region
          %s285 = ssub.s32 128, 128
          %286 = vsyncadd [#allocation3], %s285
          %s287 = sshll.u32 [#allocation2], 4
          %s288 = int_to_ptr.vmem [resolvable:$true] %s287
          %293 = dma.hbm_to_vmem [thread:$0]  %s2, 128, %s288, [#allocation3], 64, 64, 4
        $region16: #{tpu_custom_call.1} parent=11 // pred_fallthru
          _
        // Predicated region
        $region17: #{tpu_custom_call.1} parent=11 // pred_check
          %p294 = pneg %p114
        $region18: #{tpu_custom_call.1} parent=11 // pred_check_branch
          %296 = sbr.rel (%p294) target = $region20
        $region19: #{tpu_custom_call.1} parent=11 // pred_region
          _
        $region20: #{tpu_custom_call.1} parent=11 // pred_fallthru
          _
        // Predicated region
        $region21: #{tpu_custom_call.1} parent=11 // pred_check
          %p297 = pneg %p135
        $region22: #{tpu_custom_call.1} parent=11 // pred_check_branch
          %299 = sbr.rel (%p297) target = $region24
        $region23: #{tpu_custom_call.1} parent=11 // pred_region
          _
        $region24: #{tpu_custom_call.1} parent=11 // pred_fallthru
          _
        // Predicated region
        $region25: #{tpu_custom_call.1} parent=11 // pred_check
          %p300 = pneg %p156
        $region26: #{tpu_custom_call.1} parent=11 // pred_check_branch
          %302 = sbr.rel (%p300) target = $region28
        $region27: #{tpu_custom_call.1} parent=11 // pred_region
          _
        $region28: #{tpu_custom_call.1} parent=11 // pred_fallthru
          _
        // Predicated region
        $region29: #{tpu_custom_call.1} parent=11 // pred_check
          %p303 = pneg %p177
        $region30: #{tpu_custom_call.1} parent=11 // pred_check_branch
          %305 = sbr.rel (%p303) target = $region32
        $region31: #{tpu_custom_call.1} parent=11 // pred_region
          _
        $region32: #{tpu_custom_call.1} parent=11 // pred_fallthru
          _
        // Predicated region
        $region33: #{tpu_custom_call.1} parent=11 // pred_check
          %p306 = pneg %p198
        $region34: #{tpu_custom_call.1} parent=11 // pred_check_branch
          %308 = sbr.rel (%p306) target = $region36
        $region35: #{tpu_custom_call.1} parent=11 // pred_region
          _
        $region36: #{tpu_custom_call.1} parent=11 // pred_fallthru
          _
        // Predicated region
        $region37: #{tpu_custom_call.1} parent=11 // pred_check
          %p309 = pneg %p219
        $region38: #{tpu_custom_call.1} parent=11 // pred_check_branch
          %311 = sbr.rel (%p309) target = $region40
        $region39: #{tpu_custom_call.1} parent=11 // pred_region
          _
        $region40: #{tpu_custom_call.1} parent=11 // pred_fallthru
          _
        // Predicated region
        $region41: #{tpu_custom_call.1} parent=11 // pred_check
          %p312 = pneg %p240
        $region42: #{tpu_custom_call.1} parent=11 // pred_check_branch
          %314 = sbr.rel (%p312) target = $region44
        $region43: #{tpu_custom_call.1} parent=11 // pred_region
          _
        $region44: #{tpu_custom_call.1} parent=11 // pred_fallthru
          _
      $region12: #{tpu_custom_call.1} parent=5 // pred_fallthru
        _
      %p315 = scmp.lt.s32.totalorder %s20, 2
      // Predicated region
      $region45: #{tpu_custom_call.1} parent=5 // pred_check
        %p316 = pneg %p315
      $region46: #{tpu_custom_call.1} parent=5 // pred_check_branch
        %318 = sbr.rel (%p316) target = $region48
      $region47: #{tpu_custom_call.1} parent=5 // pred_region
        // Predicated region
        $region49: #{tpu_custom_call.1} parent=47 // pred_check
          %p319 = pneg %p40
        $region50: #{tpu_custom_call.1} parent=47 // pred_check_branch
          %321 = sbr.rel (%p319) target = $region52
        $region51: #{tpu_custom_call.1} parent=47 // pred_region
          %p322 = scmp.lt.s32.totalorder %s20, 1
          %s323 = scalar_select %p322, %s20, 1
          %s324 = smul.addr %s323, 16
          %s325 = smul.addr %s324, 4
          %s326 = scalar_lea.vmem %s0, %s325
        $region52: #{tpu_custom_call.1} parent=47 // pred_fallthru
          _
        // Predicated region
        $region53: #{tpu_custom_call.1} parent=47 // pred_check
          %p327 = pneg %p66
        $region54: #{tpu_custom_call.1} parent=47 // pred_check_branch
          %329 = sbr.rel (%p327) target = $region56
        $region55: #{tpu_custom_call.1} parent=47 // pred_region
          %p330 = scmp.lt.s32.totalorder %s20, 1
          %s331 = scalar_select %p330, %s20, 1
          %s332 = smul.addr %s331, 16
          %s333 = smul.addr %s332, 4
          %s334 = scalar_lea.vmem %s1, %s333
        $region56: #{tpu_custom_call.1} parent=47 // pred_fallthru
          _
      $region48: #{tpu_custom_call.1} parent=5 // pred_fallthru
        _
      %p335 = scmp.le.s32.totalorder 1, %s20
      %p336 = scmp.lt.s32.totalorder %s20, 3
      %p337 = pnand %p335, %p336
      %p338 = pneg %p337
      // Predicated region
      $region57: #{tpu_custom_call.1} parent=5 // pred_check
        _
      $region58: #{tpu_custom_call.1} parent=5 // pred_check_branch
        %340 = sbr.rel (%p337) target = $region60
      $region59: #{tpu_custom_call.1} parent=5 // pred_region
        %s341 = ssub.s32 %s20, 1
        // Predicated region
        $region61: #{tpu_custom_call.1} parent=59 // pred_check
          %p342 = pneg %p93
        $region62: #{tpu_custom_call.1} parent=59 // pred_check_branch
          %344 = sbr.rel (%p342) target = $region64
        $region63: #{tpu_custom_call.1} parent=59 // pred_region
          %345 = dma.done [#allocation3], 128
        $region64: #{tpu_custom_call.1} parent=59 // pred_fallthru
          _
        %p346 = scmp.lt.s32.totalorder %s25, 1
        %s347 = scalar_select %p346, %s25, 1
        %s348 = smul.addr %s347, 16
        %s349 = smul.addr %s348, 4
        %s350 = scalar_lea.vmem %s0, %s349
        %p351 = pneg %p46
        %p352 = pneg %p43
        %p353 = scmp.lt.s32.totalorder %s25, 1
        %s354 = scalar_select %p353, %s25, 1
        %s355 = smul.addr %s354, 16
        %s356 = smul.addr %s355, 4
        %s357 = scalar_lea.vmem %s1, %s356
        %p358 = pneg %p72
        %p359 = pneg %p69
        %p360 = pneg %p93
        %p361 = pneg %p90
        %p362 = pneg %p114
        %p363 = pneg %p111
        %p364 = pneg %p135
        %p365 = pneg %p132
        %p366 = pneg %p156
        %p367 = pneg %p153
        %p368 = pneg %p177
        %p369 = pneg %p174
        %p370 = pneg %p198
        %p371 = pneg %p195
        %p372 = pneg %p219
        %p373 = pneg %p216
        %p374 = pneg %p240
        %p375 = pneg %p237
        %p376 = pneg %p266
        %p377 = pneg %p263
        %s378 = sand.u32 %s253, 1
        %s379 = scalar_lea.sflag [#allocation4], %s378
        %s380 = sand.u32 %s253, 1
        %s381 = smul.addr %s380, 64
        %s382 = scalar_lea.vmem [#allocation5], %s381
        %p383 = scmp.lt.s32.totalorder %s25, 1
        %s384 = scalar_select %p383, %s25, 1
        %s385 = smul.addr %s384, 16
        %s386 = smul.addr %s385, 4
        %s387 = scalar_lea.vmem %s0, %s386
        %p388 = scmp.lt.s32.totalorder %s25, 1
        %s389 = scalar_select %p388, %s25, 1
        %s390 = smul.addr %s389, 16
        %s391 = smul.addr %s390, 4
        %s392 = scalar_lea.vmem %s1, %s391
        %v394 = vld [vmem:[%s387] sm:$0xff]
        %v395 = vld [vmem:[%s387 + $0x8] sm:$0xff]
        %v396 = vld [vmem:[%s387 + $0x10] sm:$0xff]
        %v397 = vld [vmem:[%s387 + $0x18] sm:$0xff]
        %v398 = vld [vmem:[%s387 + $0x20] sm:$0xff]
        %v399 = vld [vmem:[%s387 + $0x28] sm:$0xff]
        %v400 = vld [vmem:[%s387 + $0x30] sm:$0xff]
        %v401 = vld [vmem:[%s387 + $0x38] sm:$0xff]
        %v402 = vunpack.c.l.bf16 %v394
        %v403 = vunpack.c.h.bf16 %v394
        %v404 = vunpack.c.l.bf16 %v395
        %v405 = vunpack.c.h.bf16 %v395
        %v406 = vunpack.c.l.bf16 %v396
        %v407 = vunpack.c.h.bf16 %v396
        %v408 = vunpack.c.l.bf16 %v397
        %v409 = vunpack.c.h.bf16 %v397
        %v410 = vunpack.c.l.bf16 %v398
        %v411 = vunpack.c.h.bf16 %v398
        %v412 = vunpack.c.l.bf16 %v399
        %v413 = vunpack.c.h.bf16 %v399
        %v414 = vunpack.c.l.bf16 %v400
        %v415 = vunpack.c.h.bf16 %v400
        %v416 = vunpack.c.l.bf16 %v401
        %v417 = vunpack.c.h.bf16 %v401
        %v418 = vld [vmem:[%s392] sm:$0xff]
        %v419 = vld [vmem:[%s392 + $0x8] sm:$0xff]
        %v420 = vld [vmem:[%s392 + $0x10] sm:$0xff]
        %v421 = vld [vmem:[%s392 + $0x18] sm:$0xff]
        %v422 = vld [vmem:[%s392 + $0x20] sm:$0xff]
        %v423 = vld [vmem:[%s392 + $0x28] sm:$0xff]
        %v424 = vld [vmem:[%s392 + $0x30] sm:$0xff]
        %v425 = vld [vmem:[%s392 + $0x38] sm:$0xff]
        %v426 = vunpack.c.l.bf16 %v418
        %v427 = vunpack.c.h.bf16 %v418
        %v428 = vunpack.c.l.bf16 %v419
        %v429 = vunpack.c.h.bf16 %v419
        %v430 = vunpack.c.l.bf16 %v420
        %v431 = vunpack.c.h.bf16 %v420
        %v432 = vunpack.c.l.bf16 %v421
        %v433 = vunpack.c.h.bf16 %v421
        %v434 = vunpack.c.l.bf16 %v422
        %v435 = vunpack.c.h.bf16 %v422
        %v436 = vunpack.c.l.bf16 %v423
        %v437 = vunpack.c.h.bf16 %v423
        %v438 = vunpack.c.l.bf16 %v424
        %v439 = vunpack.c.h.bf16 %v424
        %v440 = vunpack.c.l.bf16 %v425
        %v441 = vunpack.c.h.bf16 %v425
        %v442 = vadd.f32 %v402, %v426
        %v443 = vadd.f32 %v403, %v427
        %v444 = vadd.f32 %v404, %v428
        %v445 = vadd.f32 %v405, %v429
        %v446 = vadd.f32 %v406, %v430
        %v447 = vadd.f32 %v407, %v431
        %v448 = vadd.f32 %v408, %v432
        %v449 = vadd.f32 %v409, %v433
        %v450 = vadd.f32 %v410, %v434
        %v451 = vadd.f32 %v411, %v435
        %v452 = vadd.f32 %v412, %v436
        %v453 = vadd.f32 %v413, %v437
        %v454 = vadd.f32 %v414, %v438
        %v455 = vadd.f32 %v415, %v439
        %v456 = vadd.f32 %v416, %v440
        %v457 = vadd.f32 %v417, %v441
        %v458 = vadd.f32 %v442, %v443
        %459 = vadd.xlane.f32.xlu0 %v458
        %v460 = vpop.xlane.xlu0 %459
        %v461 = vadd.f32 %v444, %v445
        %462 = vadd.xlane.f32.xlu0 %v461
        %v463 = vpop.xlane.xlu0 %462
        %v464 = vadd.f32 %v446, %v447
        %465 = vadd.xlane.f32.xlu0 %v464
        %v466 = vpop.xlane.xlu0 %465
        %v467 = vadd.f32 %v448, %v449
        %468 = vadd.xlane.f32.xlu0 %v467
        %v469 = vpop.xlane.xlu0 %468
        %v470 = vadd.f32 %v450, %v451
        %471 = vadd.xlane.f32.xlu0 %v470
        %v472 = vpop.xlane.xlu0 %471
        %v473 = vadd.f32 %v452, %v453
        %474 = vadd.xlane.f32.xlu0 %v473
        %v475 = vpop.xlane.xlu0 %474
        %v476 = vadd.f32 %v454, %v455
        %477 = vadd.xlane.f32.xlu0 %v476
        %v478 = vpop.xlane.xlu0 %477
        %v479 = vadd.f32 %v456, %v457
        %480 = vadd.xlane.f32.xlu0 %v479
        %v481 = vpop.xlane.xlu0 %480
        %v482 = vadd.f32 %v460, 0.0
        %v483 = vadd.f32 %v463, 0.0
        %v484 = vadd.f32 %v466, 0.0
        %v485 = vadd.f32 %v469, 0.0
        %v486 = vadd.f32 %v472, 0.0
        %v487 = vadd.f32 %v475, 0.0
        %v488 = vadd.f32 %v478, 0.0
        %v489 = vadd.f32 %v481, 0.0
        %v490 = vmul.f32 %v482, 0.00390625
        %v491 = vmul.f32 %v483, 0.00390625
        %v492 = vmul.f32 %v484, 0.00390625
        %v493 = vmul.f32 %v485, 0.00390625
        %v494 = vmul.f32 %v486, 0.00390625
        %v495 = vmul.f32 %v487, 0.00390625
        %v496 = vmul.f32 %v488, 0.00390625
        %v497 = vmul.f32 %v489, 0.00390625
        %v498 = vld [vmem:[%s6] sm:$0xff]
        %v499 = vld [vmem:[%s6 + $0x8] sm:$0xff]
        %v500 = vld [vmem:[%s7] sm:$0xff]
        %v501 = vld [vmem:[%s7 + $0x8] sm:$0xff]
        %vm502 = vcmask 523264
        %v504 = vsel %vm502, %v498, 0
        %v507 = vsel %vm502, %v499, 0
        %509 = vmatprep.subr.mxu0 0.0
        %510 = vmatpush1.msra.mxu0 %v490
        %511 = vmatprep.subr.mxu0 0.0
        %512 = vmatpush1.msra.mxu0 %v491
        %513 = vmatprep.subr.mxu0 0.0
        %514 = vmatpush1.msra.mxu0 %v492
        %515 = vmatprep.subr.mxu0 0.0
        %516 = vmatpush1.msra.mxu0 %v493
        %517 = vmatprep.subr.mxu0 0.0
        %518 = vmatpush1.msra.mxu0 %v494
        %519 = vmatprep.subr.mxu0 0.0
        %520 = vmatpush1.msra.mxu0 %v495
        %521 = vmatprep.subr.mxu0 0.0
        %522 = vmatpush1.msra.mxu0 %v496
        %523 = vmatprep.subr.mxu0 0.0
        %524 = vmatpush1.msra.mxu0 %v497
        %525 = vmatprep.subr.mxu0 0.0
        %526 = vmatpush1.msra.mxu0 0.0
        %527 = vmatprep.subr.mxu0 0.0
        %528 = vmatpush1.msra.mxu0 0.0
        %529 = vmatprep.subr.mxu0 0.0
        %530 = vmatpush1.msra.mxu0 0.0
        %531 = vmatprep.subr.mxu0 0.0
        %532 = vmatpush1.msra.mxu0 0.0
        %533 = vmatprep.subr.mxu0 0.0
        %534 = vmatpush1.msra.mxu0 0.0
        %535 = vmatprep.subr.mxu0 0.0
        %536 = vmatpush1.msra.mxu0 0.0
        %537 = vmatprep.subr.mxu0 0.0
        %538 = vmatpush1.msra.mxu0 0.0
        %539 = vmatprep.subr.mxu0 0.0
        %540 = vmatpush1.msra.mxu0 0.0
        %541 = vmatprep.subr.mxu0 0.0
        %542 = vmatpush1.msra.mxu0 0.0
        %543 = vmatprep.subr.mxu0 0.0
        %544 = vmatpush1.msra.mxu0 0.0
        %545 = vmatprep.subr.mxu0 0.0
        %546 = vmatpush1.msra.mxu0 0.0
        %547 = vmatprep.subr.mxu0 0.0
        %548 = vmatpush1.msra.mxu0 0.0
        %549 = vmatprep.subr.mxu0 0.0
        %550 = vmatpush1.msra.mxu0 0.0
        %551 = vmatprep.subr.mxu0 0.0
        %552 = vmatpush1.msra.mxu0 0.0
        %553 = vmatprep.subr.mxu0 0.0
        %554 = vmatpush1.msra.mxu0 0.0
        %555 = vmatprep.subr.mxu0 0.0
        %556 = vmatpush1.msra.mxu0 0.0
        %557 = vmatprep.subr.mxu0 0.0
        %558 = vmatpush1.msra.mxu0 0.0
        %559 = vmatprep.subr.mxu0 0.0
        %560 = vmatpush1.msra.mxu0 0.0
        %561 = vmatprep.subr.mxu0 0.0
        %562 = vmatpush1.msra.mxu0 0.0
        %563 = vmatprep.subr.mxu0 0.0
        %564 = vmatpush1.msra.mxu0 0.0
        %565 = vmatprep.subr.mxu0 0.0
        %566 = vmatpush1.msra.mxu0 0.0
        %567 = vmatprep.subr.mxu0 0.0
        %568 = vmatpush1.msra.mxu0 0.0
        %569 = vmatprep.subr.mxu0 0.0
        %570 = vmatpush1.msra.mxu0 0.0
        %571 = vmatprep.subr.mxu0 0.0
        %572 = vmatpush1.msra.mxu0 0.0
        %573 = vmatprep.mubr.f32.mxu0 0.0
        %574 = vmatmul.mubr.f32.gmra.mrb[0].mxu0 %v504
        %v575 = vpop.f32.mrb[0].mxu0
        %v576 = vadd.f32 %v500, %v575
        %v577 = vpop.f32.mrb[0].mxu0
        %578 = vmatprep.mubr.f32.mxu0 0.0
        %579 = vmatmul.mubr.f32.gmra.mrb[0].mxu0 %v507
        %v580 = vpop.f32.mrb[0].mxu0
        %v581 = vadd.f32 %v501, %v580
        %v582 = vpop.f32.mrb[0].mxu0
        %583 = vdwg.mxu0
        %v584 = vmax.f32 %v576, 0.0
        %v585 = vmax.f32 %v581, 0.0
        %v586 = vld [vmem:[%s8] sm:$0xff]
        %v587 = vld [vmem:[%s8 + $0x8] sm:$0xff]
        %v588 = vld [vmem:[%s8 + $0x10] sm:$0xff]
        %v589 = vld [vmem:[%s8 + $0x18] sm:$0xff]
        %v590 = vld [vmem:[%s8 + $0x20] sm:$0xff]
        %v591 = vld [vmem:[%s8 + $0x28] sm:$0xff]
        %v592 = vld [vmem:[%s8 + $0x30] sm:$0xff]
        %v593 = vld [vmem:[%s8 + $0x38] sm:$0xff]
        %v594 = vld [vmem:[%s9] sm:$0xff]
        %v595 = vld [vmem:[%s9 + $0x8] sm:$0xff]
        %v596 = vld [vmem:[%s9 + $0x10] sm:$0xff]
        %v597 = vld [vmem:[%s9 + $0x18] sm:$0xff]
        %v598 = vld [vmem:[%s9 + $0x20] sm:$0xff]
        %v599 = vld [vmem:[%s9 + $0x28] sm:$0xff]
        %v600 = vld [vmem:[%s9 + $0x30] sm:$0xff]
        %v601 = vld [vmem:[%s9 + $0x38] sm:$0xff]
        %vm602 = vcmask 130048
        %v604 = vsel %vm602, %v586, 0
        %v607 = vsel %vm602, %v587, 0
        %v610 = vsel %vm602, %v588, 0
        %v613 = vsel %vm602, %v589, 0
        %v616 = vsel %vm602, %v590, 0
        %v619 = vsel %vm602, %v591, 0
        %v622 = vsel %vm602, %v592, 0
        %v625 = vsel %vm602, %v593, 0
        %627 = vmatprep.subr.mxu0 0.0
        %628 = vmatpush1.msra.mxu0 %v584
        %629 = vmatprep.subr.mxu0 0.0
        %630 = vmatpush1.msra.mxu0 %v585
        %631 = vmatprep.subr.mxu0 0.0
        %632 = vmatpush1.msra.mxu0 0.0
        %633 = vmatprep.subr.mxu0 0.0
        %634 = vmatpush1.msra.mxu0 0.0
        %635 = vmatprep.subr.mxu0 0.0
        %636 = vmatpush1.msra.mxu0 0.0
        %637 = vmatprep.subr.mxu0 0.0
        %638 = vmatpush1.msra.mxu0 0.0
        %639 = vmatprep.subr.mxu0 0.0
        %640 = vmatpush1.msra.mxu0 0.0
        %641 = vmatprep.subr.mxu0 0.0
        %642 = vmatpush1.msra.mxu0 0.0
        %643 = vmatprep.subr.mxu0 0.0
        %644 = vmatpush1.msra.mxu0 0.0
        %645 = vmatprep.subr.mxu0 0.0
        %646 = vmatpush1.msra.mxu0 0.0
        %647 = vmatprep.subr.mxu0 0.0
        %648 = vmatpush1.msra.mxu0 0.0
        %649 = vmatprep.subr.mxu0 0.0
        %650 = vmatpush1.msra.mxu0 0.0
        %651 = vmatprep.subr.mxu0 0.0
        %652 = vmatpush1.msra.mxu0 0.0
        %653 = vmatprep.subr.mxu0 0.0
        %654 = vmatpush1.msra.mxu0 0.0
        %655 = vmatprep.subr.mxu0 0.0
        %656 = vmatpush1.msra.mxu0 0.0
        %657 = vmatprep.subr.mxu0 0.0
        %658 = vmatpush1.msra.mxu0 0.0
        %659 = vmatprep.subr.mxu0 0.0
        %660 = vmatpush1.msra.mxu0 0.0
        %661 = vmatprep.subr.mxu0 0.0
        %662 = vmatpush1.msra.mxu0 0.0
        %663 = vmatprep.subr.mxu0 0.0
        %664 = vmatpush1.msra.mxu0 0.0
        %665 = vmatprep.subr.mxu0 0.0
        %666 = vmatpush1.msra.mxu0 0.0
        %667 = vmatprep.subr.mxu0 0.0
        %668 = vmatpush1.msra.mxu0 0.0
        %669 = vmatprep.subr.mxu0 0.0
        %670 = vmatpush1.msra.mxu0 0.0
        %671 = vmatprep.subr.mxu0 0.0
        %672 = vmatpush1.msra.mxu0 0.0
        %673 = vmatprep.subr.mxu0 0.0
        %674 = vmatpush1.msra.mxu0 0.0
        %675 = vmatprep.subr.mxu0 0.0
        %676 = vmatpush1.msra.mxu0 0.0
        %677 = vmatprep.subr.mxu0 0.0
        %678 = vmatpush1.msra.mxu0 0.0
        %679 = vmatprep.subr.mxu0 0.0
        %680 = vmatpush1.msra.mxu0 0.0
        %681 = vmatprep.subr.mxu0 0.0
        %682 = vmatpush1.msra.mxu0 0.0
        %683 = vmatprep.subr.mxu0 0.0
        %684 = vmatpush1.msra.mxu0 0.0
        %685 = vmatprep.subr.mxu0 0.0
        %686 = vmatpush1.msra.mxu0 0.0
        %687 = vmatprep.subr.mxu0 0.0
        %688 = vmatpush1.msra.mxu0 0.0
        %689 = vmatprep.subr.mxu0 0.0
        %690 = vmatpush1.msra.mxu0 0.0
        %691 = vmatprep.mubr.f32.mxu0 0.0
        %692 = vmatmul.mubr.f32.gmra.mrb[0].mxu0 %v604
        %v693 = vpop.f32.mrb[0].mxu0
        %v694 = vadd.f32 %v594, %v693
        %v695 = vpop.f32.mrb[0].mxu0
        %696 = vmatprep.mubr.f32.mxu0 0.0
        %697 = vmatmul.mubr.f32.gmra.mrb[0].mxu0 %v607
        %v698 = vpop.f32.mrb[0].mxu0
        %v699 = vadd.f32 %v595, %v698
        %v700 = vpop.f32.mrb[0].mxu0
        %701 = vmatprep.mubr.f32.mxu0 0.0
        %702 = vmatmul.mubr.f32.gmra.mrb[0].mxu0 %v610
        %v703 = vpop.f32.mrb[0].mxu0
        %v704 = vadd.f32 %v596, %v703
        %v705 = vpop.f32.mrb[0].mxu0
        %706 = vmatprep.mubr.f32.mxu0 0.0
        %707 = vmatmul.mubr.f32.gmra.mrb[0].mxu0 %v613
        %v708 = vpop.f32.mrb[0].mxu0
        %v709 = vadd.f32 %v597, %v708
        %v710 = vpop.f32.mrb[0].mxu0
        %711 = vmatprep.mubr.f32.mxu0 0.0
        %712 = vmatmul.mubr.f32.gmra.mrb[0].mxu0 %v616
        %v713 = vpop.f32.mrb[0].mxu0
        %v714 = vadd.f32 %v598, %v713
        %v715 = vpop.f32.mrb[0].mxu0
        %716 = vmatprep.mubr.f32.mxu0 0.0
        %717 = vmatmul.mubr.f32.gmra.mrb[0].mxu0 %v619
        %v718 = vpop.f32.mrb[0].mxu0
        %v719 = vadd.f32 %v599, %v718
        %v720 = vpop.f32.mrb[0].mxu0
        %721 = vmatprep.mubr.f32.mxu0 0.0
        %722 = vmatmul.mubr.f32.gmra.mrb[0].mxu0 %v622
        %v723 = vpop.f32.mrb[0].mxu0
        %v724 = vadd.f32 %v600, %v723
        %v725 = vpop.f32.mrb[0].mxu0
        %726 = vmatprep.mubr.f32.mxu0 0.0
        %727 = vmatmul.mubr.f32.gmra.mrb[0].mxu0 %v625
        %v728 = vpop.f32.mrb[0].mxu0
        %v729 = vadd.f32 %v601, %v728
        %v730 = vpop.f32.mrb[0].mxu0
        %731 = vdwg.mxu0
        %v732 = vld [vmem:[%s5] sm:$0xff]
        %v733 = vld [vmem:[%s5 + $0x8] sm:$0xff]
        %v734 = vld [vmem:[%s5 + $0x10] sm:$0xff]
        %v735 = vld [vmem:[%s5 + $0x18] sm:$0xff]
        %v736 = vld [vmem:[%s5 + $0x20] sm:$0xff]
        %v737 = vld [vmem:[%s5 + $0x28] sm:$0xff]
        %v738 = vld [vmem:[%s5 + $0x30] sm:$0xff]
        %v739 = vld [vmem:[%s5 + $0x38] sm:$0xff]
        %v740 = vadd.f32 %v732, %v694
        %v741 = vadd.f32 %v733, %v699
        %v742 = vadd.f32 %v734, %v704
        %v743 = vadd.f32 %v735, %v709
        %v744 = vadd.f32 %v736, %v714
        %v745 = vadd.f32 %v737, %v719
        %v746 = vadd.f32 %v738, %v724
        %v747 = vadd.f32 %v739, %v729
        %v748 = vadd.bf16 %v394, %v418
        %v749 = vadd.bf16 %v395, %v419
        %v750 = vadd.bf16 %v396, %v420
        %v751 = vadd.bf16 %v397, %v421
        %v752 = vadd.bf16 %v398, %v422
        %v753 = vadd.bf16 %v399, %v423
        %v754 = vadd.bf16 %v400, %v424
        %v755 = vadd.bf16 %v401, %v425
        %v756 = vld [vmem:[#allocation2] sm:$0xf]
        %v757 = vld [vmem:[#allocation2 + $0x4] sm:$0xf]
        %v758 = vld [vmem:[%s3] sm:$0xff]
        %v759 = vld [vmem:[%s3 + $0x8] sm:$0xff]
        %761 = vset.pattern.permute.xlu0 0
        %762 = vperm.xlu0 %761, %v758
        %v763 = vpop.permute.xlu0 %762
        %766 = vset.pattern.permute.xlu0 0
        %767 = vperm.xlu0 %766, %v759
        %v768 = vpop.permute.xlu0 %767
        %v772 = vunpack.c.l.b16 %v756
        %v773 = vunpack.c.l.b16 %v757
        %v774 = vpack.c.b16 %v773, %v772
        %v783 = vunpack.c.l.b16 %v748
        %v784 = vunpack.c.h.b16 %v748
        %v785 = vunpack.c.l.b16 %v749
        %v786 = vunpack.c.h.b16 %v749
        %v787 = vunpack.c.l.b16 %v750
        %v788 = vunpack.c.h.b16 %v750
        %v789 = vunpack.c.l.b16 %v751
        %v790 = vunpack.c.h.b16 %v751
        %v791 = vunpack.c.l.b16 %v752
        %v792 = vunpack.c.h.b16 %v752
        %v793 = vunpack.c.l.b16 %v753
        %v794 = vunpack.c.h.b16 %v753
        %v795 = vunpack.c.l.b16 %v754
        %v796 = vunpack.c.h.b16 %v754
        %v797 = vunpack.c.l.b16 %v755
        %v798 = vunpack.c.h.b16 %v755
        %v799 = vpack.c.b16 %v785, %v783
        %v800 = vpack.c.b16 %v786, %v784
        %v801 = vpack.c.b16 %v789, %v787
        %v802 = vpack.c.b16 %v790, %v788
        %v803 = vpack.c.b16 %v793, %v791
        %v804 = vpack.c.b16 %v794, %v792
        %v805 = vpack.c.b16 %v797, %v795
        %v806 = vpack.c.b16 %v798, %v796
        %v816 = vsel %vm502, %v774, 0
        %818 = vmatprep.subr.bf16.mxu0 %v800
        %819 = vmatpush1.bf16.msra.mxu0 %v799
        %820 = vmatprep.subr.bf16.mxu0 %v802
        %821 = vmatpush1.bf16.msra.mxu0 %v801
        %822 = vmatprep.subr.bf16.mxu0 %v804
        %823 = vmatpush1.bf16.msra.mxu0 %v803
        %824 = vmatprep.subr.bf16.mxu0 %v806
        %825 = vmatpush1.bf16.msra.mxu0 %v805
        %826 = vmatprep.subr.bf16.mxu0 0
        %827 = vmatpush1.bf16.msra.mxu0 0
        %828 = vmatprep.subr.bf16.mxu0 0
        %829 = vmatpush1.bf16.msra.mxu0 0
        %830 = vmatprep.subr.bf16.mxu0 0
        %831 = vmatpush1.bf16.msra.mxu0 0
        %832 = vmatprep.subr.bf16.mxu0 0
        %833 = vmatpush1.bf16.msra.mxu0 0
        %834 = vmatprep.subr.bf16.mxu0 0
        %835 = vmatpush1.bf16.msra.mxu0 0
        %836 = vmatprep.subr.bf16.mxu0 0
        %837 = vmatpush1.bf16.msra.mxu0 0
        %838 = vmatprep.subr.bf16.mxu0 0
        %839 = vmatpush1.bf16.msra.mxu0 0
        %840 = vmatprep.subr.bf16.mxu0 0
        %841 = vmatpush1.bf16.msra.mxu0 0
        %842 = vmatprep.subr.bf16.mxu0 0
        %843 = vmatpush1.bf16.msra.mxu0 0
        %844 = vmatprep.subr.bf16.mxu0 0
        %845 = vmatpush1.bf16.msra.mxu0 0
        %846 = vmatprep.subr.bf16.mxu0 0
        %847 = vmatpush1.bf16.msra.mxu0 0
        %848 = vmatprep.subr.bf16.mxu0 0
        %849 = vmatpush1.bf16.msra.mxu0 0
        %850 = vmatprep.mubr.bf16.mxu0 0
        %851 = vmatmul.mubr.bf16.gmra.mrb[0].mxu0 %v816
        %v852 = vpop.f32.mrb[0].mxu0
        %v853 = vadd.f32 %v763, %v852
        %v854 = vpop.f32.mrb[0].mxu0
        %v855 = vadd.f32 %v763, %v854
        %v856 = vpop.f32.mrb[0].mxu0
        %v857 = vadd.f32 %v768, %v856
        %v858 = vpop.f32.mrb[0].mxu0
        %v859 = vadd.f32 %v768, %v858
        %860 = vdwg.mxu0
        %v861 = vmax.f32 %v853, 0.0
        %v862 = vmax.f32 %v855, 0.0
        %v863 = vmax.f32 %v857, 0.0
        %v864 = vmax.f32 %v859, 0.0
        %v865 = vld [vmem:[%s4] sm:$0xf]
        %v866 = vld [vmem:[%s4 + $0x4] sm:$0xf]
        %v867 = vld [vmem:[%s4 + $0x8] sm:$0xf]
        %v868 = vld [vmem:[%s4 + $0xc] sm:$0xf]
        %v869 = vld [vmem:[%s4 + $0x10] sm:$0xf]
        %v870 = vld [vmem:[%s4 + $0x14] sm:$0xf]
        %v871 = vld [vmem:[%s4 + $0x18] sm:$0xf]
        %v872 = vld [vmem:[%s4 + $0x1c] sm:$0xf]
        %v873 = vpack.c.bf16 %v863, %v861
        %v874 = vpack.c.bf16 %v864, %v862
        %876 = vset.pattern.permute.xlu0 0
        %877 = vperm.xlu0 %876, %v740
        %v878 = vpop.permute.xlu0 %877
        %881 = vset.pattern.permute.xlu0 0
        %882 = vperm.xlu0 %881, %v741
        %v883 = vpop.permute.xlu0 %882
        %886 = vset.pattern.permute.xlu0 0
        %887 = vperm.xlu0 %886, %v742
        %v888 = vpop.permute.xlu0 %887
        %891 = vset.pattern.permute.xlu0 0
        %892 = vperm.xlu0 %891, %v743
        %v893 = vpop.permute.xlu0 %892
        %896 = vset.pattern.permute.xlu0 0
        %897 = vperm.xlu0 %896, %v744
        %v898 = vpop.permute.xlu0 %897
        %901 = vset.pattern.permute.xlu0 0
        %902 = vperm.xlu0 %901, %v745
        %v903 = vpop.permute.xlu0 %902
        %906 = vset.pattern.permute.xlu0 0
        %907 = vperm.xlu0 %906, %v746
        %v908 = vpop.permute.xlu0 %907
        %911 = vset.pattern.permute.xlu0 0
        %912 = vperm.xlu0 %911, %v747
        %v913 = vpop.permute.xlu0 %912
        %v923 = vunpack.c.l.b16 %v865
        %v924 = vunpack.c.l.b16 %v866
        %v925 = vunpack.c.l.b16 %v867
        %v926 = vunpack.c.l.b16 %v868
        %v927 = vunpack.c.l.b16 %v869
        %v928 = vunpack.c.l.b16 %v870
        %v929 = vunpack.c.l.b16 %v871
        %v930 = vunpack.c.l.b16 %v872
        %v931 = vpack.c.b16 %v924, %v923
        %v932 = vpack.c.b16 %v926, %v925
        %v933 = vpack.c.b16 %v928, %v927
        %v934 = vpack.c.b16 %v930, %v929
        %v936 = vsel %vm602, %v931, 0
        %v939 = vsel %vm602, %v932, 0
        %v942 = vsel %vm602, %v933, 0
        %v945 = vsel %vm602, %v934, 0
        %947 = vmatprep.subr.bf16.mxu0 %v874
        %948 = vmatpush1.bf16.msra.mxu0 %v873
        %949 = vmatprep.subr.bf16.mxu0 0
        %950 = vmatpush1.bf16.msra.mxu0 0
        %951 = vmatprep.subr.bf16.mxu0 0
        %952 = vmatpush1.bf16.msra.mxu0 0
        %953 = vmatprep.subr.bf16.mxu0 0
        %954 = vmatpush1.bf16.msra.mxu0 0
        %955 = vmatprep.subr.bf16.mxu0 0
        %956 = vmatpush1.bf16.msra.mxu0 0
        %957 = vmatprep.subr.bf16.mxu0 0
        %958 = vmatpush1.bf16.msra.mxu0 0
        %959 = vmatprep.subr.bf16.mxu0 0
        %960 = vmatpush1.bf16.msra.mxu0 0
        %961 = vmatprep.subr.bf16.mxu0 0
        %962 = vmatpush1.bf16.msra.mxu0 0
        %963 = vmatprep.subr.bf16.mxu0 0
        %964 = vmatpush1.bf16.msra.mxu0 0
        %965 = vmatprep.subr.bf16.mxu0 0
        %966 = vmatpush1.bf16.msra.mxu0 0
        %967 = vmatprep.subr.bf16.mxu0 0
        %968 = vmatpush1.bf16.msra.mxu0 0
        %969 = vmatprep.subr.bf16.mxu0 0
        %970 = vmatpush1.bf16.msra.mxu0 0
        %971 = vmatprep.subr.bf16.mxu0 0
        %972 = vmatpush1.bf16.msra.mxu0 0
        %973 = vmatprep.subr.bf16.mxu0 0
        %974 = vmatpush1.bf16.msra.mxu0 0
        %975 = vmatprep.subr.bf16.mxu0 0
        %976 = vmatpush1.bf16.msra.mxu0 0
        %977 = vmatprep.subr.bf16.mxu0 0
        %978 = vmatpush1.bf16.msra.mxu0 0
        %979 = vmatprep.mubr.bf16.mxu0 0
        %980 = vmatmul.mubr.bf16.gmra.mrb[0].mxu0 %v936
        %v981 = vpop.f32.mrb[0].mxu0
        %v982 = vadd.f32 %v878, %v981
        %v983 = vpop.f32.mrb[0].mxu0
        %v984 = vadd.f32 %v878, %v983
        %v985 = vpop.f32.mrb[0].mxu0
        %v986 = vadd.f32 %v883, %v985
        %v987 = vpop.f32.mrb[0].mxu0
        %v988 = vadd.f32 %v883, %v987
        %989 = vmatprep.mubr.bf16.mxu0 0
        %990 = vmatmul.mubr.bf16.gmra.mrb[0].mxu0 %v939
        %v991 = vpop.f32.mrb[0].mxu0
        %v992 = vadd.f32 %v888, %v991
        %v993 = vpop.f32.mrb[0].mxu0
        %v994 = vadd.f32 %v888, %v993
        %v995 = vpop.f32.mrb[0].mxu0
        %v996 = vadd.f32 %v893, %v995
        %v997 = vpop.f32.mrb[0].mxu0
        %v998 = vadd.f32 %v893, %v997
        %999 = vmatprep.mubr.bf16.mxu0 0
        %1000 = vmatmul.mubr.bf16.gmra.mrb[0].mxu0 %v942
        %v1001 = vpop.f32.mrb[0].mxu0
        %v1002 = vadd.f32 %v898, %v1001
        %v1003 = vpop.f32.mrb[0].mxu0
        %v1004 = vadd.f32 %v898, %v1003
        %v1005 = vpop.f32.mrb[0].mxu0
        %v1006 = vadd.f32 %v903, %v1005
        %v1007 = vpop.f32.mrb[0].mxu0
        %v1008 = vadd.f32 %v903, %v1007
        %1009 = vmatprep.mubr.bf16.mxu0 0
        %1010 = vmatmul.mubr.bf16.gmra.mrb[0].mxu0 %v945
        %v1011 = vpop.f32.mrb[0].mxu0
        %v1012 = vadd.f32 %v908, %v1011
        %v1013 = vpop.f32.mrb[0].mxu0
        %v1014 = vadd.f32 %v908, %v1013
        %v1015 = vpop.f32.mrb[0].mxu0
        %v1016 = vadd.f32 %v913, %v1015
        %v1017 = vpop.f32.mrb[0].mxu0
        %v1018 = vadd.f32 %v913, %v1017
        %1019 = vdwg.mxu0
        %v1020 = vxor.u32 %v982, 2147483648
        %v1021 = vxor.u32 %v984, 2147483648
        %v1022 = vxor.u32 %v986, 2147483648
        %v1023 = vxor.u32 %v988, 2147483648
        %v1024 = vxor.u32 %v992, 2147483648
        %v1025 = vxor.u32 %v994, 2147483648
        %v1026 = vxor.u32 %v996, 2147483648
        %v1027 = vxor.u32 %v998, 2147483648
        %v1028 = vxor.u32 %v1002, 2147483648
        %v1029 = vxor.u32 %v1004, 2147483648
        %v1030 = vxor.u32 %v1006, 2147483648
        %v1031 = vxor.u32 %v1008, 2147483648
        %v1032 = vxor.u32 %v1012, 2147483648
        %v1033 = vxor.u32 %v1014, 2147483648
        %v1034 = vxor.u32 %v1016, 2147483648
        %v1035 = vxor.u32 %v1018, 2147483648
        %v1036 = vmul.f32 %v1020, 1.442695
        %v1037 = vpow.pop %v1036
        %v1038 = vmul.f32 %v1021, 1.442695
        %v1039 = vpow.pop %v1038
        %v1040 = vmul.f32 %v1022, 1.442695
        %v1041 = vpow.pop %v1040
        %v1042 = vmul.f32 %v1023, 1.442695
        %v1043 = vpow.pop %v1042
        %v1044 = vmul.f32 %v1024, 1.442695
        %v1045 = vpow.pop %v1044
        %v1046 = vmul.f32 %v1025, 1.442695
        %v1047 = vpow.pop %v1046
        %v1048 = vmul.f32 %v1026, 1.442695
        %v1049 = vpow.pop %v1048
        %v1050 = vmul.f32 %v1027, 1.442695
        %v1051 = vpow.pop %v1050
        %v1052 = vmul.f32 %v1028, 1.442695
        %v1053 = vpow.pop %v1052
        %v1054 = vmul.f32 %v1029, 1.442695
        %v1055 = vpow.pop %v1054
        %v1056 = vmul.f32 %v1030, 1.442695
        %v1057 = vpow.pop %v1056
        %v1058 = vmul.f32 %v1031, 1.442695
        %v1059 = vpow.pop %v1058
        %v1060 = vmul.f32 %v1032, 1.442695
        %v1061 = vpow.pop %v1060
        %v1062 = vmul.f32 %v1033, 1.442695
        %v1063 = vpow.pop %v1062
        %v1064 = vmul.f32 %v1034, 1.442695
        %v1065 = vpow.pop %v1064
        %v1066 = vmul.f32 %v1035, 1.442695
        %v1067 = vpow.pop %v1066
        %v1068 = vadd.f32 %v1037, 1.0
        %v1069 = vadd.f32 %v1039, 1.0
        %v1070 = vadd.f32 %v1041, 1.0
        %v1071 = vadd.f32 %v1043, 1.0
        %v1072 = vadd.f32 %v1045, 1.0
        %v1073 = vadd.f32 %v1047, 1.0
        %v1074 = vadd.f32 %v1049, 1.0
        %v1075 = vadd.f32 %v1051, 1.0
        %v1076 = vadd.f32 %v1053, 1.0
        %v1077 = vadd.f32 %v1055, 1.0
        %v1078 = vadd.f32 %v1057, 1.0
        %v1079 = vadd.f32 %v1059, 1.0
        %v1080 = vadd.f32 %v1061, 1.0
        %v1081 = vadd.f32 %v1063, 1.0
        %v1082 = vadd.f32 %v1065, 1.0
        %v1083 = vadd.f32 %v1067, 1.0
        %v1084 = vrcp.pop %v1068
        %v1085 = vmul.f32 1.0, %v1084
        %v1086 = vrcp.pop %v1069
        %v1087 = vmul.f32 1.0, %v1086
        %v1088 = vrcp.pop %v1070
        %v1089 = vmul.f32 1.0, %v1088
        %v1090 = vrcp.pop %v1071
        %v1091 = vmul.f32 1.0, %v1090
        %v1092 = vrcp.pop %v1072
        %v1093 = vmul.f32 1.0, %v1092
        %v1094 = vrcp.pop %v1073
        %v1095 = vmul.f32 1.0, %v1094
        %v1096 = vrcp.pop %v1074
        %v1097 = vmul.f32 1.0, %v1096
        %v1098 = vrcp.pop %v1075
        %v1099 = vmul.f32 1.0, %v1098
        %v1100 = vrcp.pop %v1076
        %v1101 = vmul.f32 1.0, %v1100
        %v1102 = vrcp.pop %v1077
        %v1103 = vmul.f32 1.0, %v1102
        %v1104 = vrcp.pop %v1078
        %v1105 = vmul.f32 1.0, %v1104
        %v1106 = vrcp.pop %v1079
        %v1107 = vmul.f32 1.0, %v1106
        %v1108 = vrcp.pop %v1080
        %v1109 = vmul.f32 1.0, %v1108
        %v1110 = vrcp.pop %v1081
        %v1111 = vmul.f32 1.0, %v1110
        %v1112 = vrcp.pop %v1082
        %v1113 = vmul.f32 1.0, %v1112
        %v1114 = vrcp.pop %v1083
        %v1115 = vmul.f32 1.0, %v1114
        %v1116 = vsub.f32 %v402, %v426
        %v1117 = vsub.f32 %v403, %v427
        %v1118 = vsub.f32 %v404, %v428
        %v1119 = vsub.f32 %v405, %v429
        %v1120 = vsub.f32 %v406, %v430
        %v1121 = vsub.f32 %v407, %v431
        %v1122 = vsub.f32 %v408, %v432
        %v1123 = vsub.f32 %v409, %v433
        %v1124 = vsub.f32 %v410, %v434
        %v1125 = vsub.f32 %v411, %v435
        %v1126 = vsub.f32 %v412, %v436
        %v1127 = vsub.f32 %v413, %v437
        %v1128 = vsub.f32 %v414, %v438
        %v1129 = vsub.f32 %v415, %v439
        %v1130 = vsub.f32 %v416, %v440
        %v1131 = vsub.f32 %v417, %v441
        %v1132 = vmul.f32 %v1085, %v1116
        %v1133 = vmul.f32 %v1087, %v1117
        %v1134 = vmul.f32 %v1089, %v1118
        %v1135 = vmul.f32 %v1091, %v1119
        %v1136 = vmul.f32 %v1093, %v1120
        %v1137 = vmul.f32 %v1095, %v1121
        %v1138 = vmul.f32 %v1097, %v1122
        %v1139 = vmul.f32 %v1099, %v1123
        %v1140 = vmul.f32 %v1101, %v1124
        %v1141 = vmul.f32 %v1103, %v1125
        %v1142 = vmul.f32 %v1105, %v1126
        %v1143 = vmul.f32 %v1107, %v1127
        %v1144 = vmul.f32 %v1109, %v1128
        %v1145 = vmul.f32 %v1111, %v1129
        %v1146 = vmul.f32 %v1113, %v1130
        %v1147 = vmul.f32 %v1115, %v1131
        %v1148 = vadd.f32 %v426, %v1132
        %v1149 = vadd.f32 %v427, %v1133
        %v1150 = vadd.f32 %v428, %v1134
        %v1151 = vadd.f32 %v429, %v1135
        %v1152 = vadd.f32 %v430, %v1136
        %v1153 = vadd.f32 %v431, %v1137
        %v1154 = vadd.f32 %v432, %v1138
        %v1155 = vadd.f32 %v433, %v1139
        %v1156 = vadd.f32 %v434, %v1140
        %v1157 = vadd.f32 %v435, %v1141
        %v1158 = vadd.f32 %v436, %v1142
        %v1159 = vadd.f32 %v437, %v1143
        %v1160 = vadd.f32 %v438, %v1144
        %v1161 = vadd.f32 %v439, %v1145
        %v1162 = vadd.f32 %v440, %v1146
        %v1163 = vadd.f32 %v441, %v1147
        %v1164 = vmul.f32 %v1148, 2.0
        %v1165 = vmul.f32 %v1149, 2.0
        %v1166 = vmul.f32 %v1150, 2.0
        %v1167 = vmul.f32 %v1151, 2.0
        %v1168 = vmul.f32 %v1152, 2.0
        %v1169 = vmul.f32 %v1153, 2.0
        %v1170 = vmul.f32 %v1154, 2.0
        %v1171 = vmul.f32 %v1155, 2.0
        %v1172 = vmul.f32 %v1156, 2.0
        %v1173 = vmul.f32 %v1157, 2.0
        %v1174 = vmul.f32 %v1158, 2.0
        %v1175 = vmul.f32 %v1159, 2.0
        %v1176 = vmul.f32 %v1160, 2.0
        %v1177 = vmul.f32 %v1161, 2.0
        %v1178 = vmul.f32 %v1162, 2.0
        %v1179 = vmul.f32 %v1163, 2.0
        %v1180 = vpack.c.bf16 %v1166, %v1164
        %v1181 = vpack.c.bf16 %v1167, %v1165
        %v1182 = vpack.c.bf16 %v1170, %v1168
        %v1183 = vpack.c.bf16 %v1171, %v1169
        %v1184 = vpack.c.bf16 %v1174, %v1172
        %v1185 = vpack.c.bf16 %v1175, %v1173
        %v1186 = vpack.c.bf16 %v1178, %v1176
        %v1187 = vpack.c.bf16 %v1179, %v1177
        %v1196 = vunpack.c.l.b16 %v1180
        %v1197 = vunpack.c.l.b16 %v1181
        %v1198 = vunpack.c.h.b16 %v1180
        %v1199 = vunpack.c.h.b16 %v1181
        %v1200 = vunpack.c.l.b16 %v1182
        %v1201 = vunpack.c.l.b16 %v1183
        %v1202 = vunpack.c.h.b16 %v1182
        %v1203 = vunpack.c.h.b16 %v1183
        %v1204 = vunpack.c.l.b16 %v1184
        %v1205 = vunpack.c.l.b16 %v1185
        %v1206 = vunpack.c.h.b16 %v1184
        %v1207 = vunpack.c.h.b16 %v1185
        %v1208 = vunpack.c.l.b16 %v1186
        %v1209 = vunpack.c.l.b16 %v1187
        %v1210 = vunpack.c.h.b16 %v1186
        %v1211 = vunpack.c.h.b16 %v1187
        %v1212 = vpack.c.b16 %v1197, %v1196
        %v1213 = vpack.c.b16 %v1199, %v1198
        %v1214 = vpack.c.b16 %v1201, %v1200
        %v1215 = vpack.c.b16 %v1203, %v1202
        %v1216 = vpack.c.b16 %v1205, %v1204
        %v1217 = vpack.c.b16 %v1207, %v1206
        %v1218 = vpack.c.b16 %v1209, %v1208
        %v1219 = vpack.c.b16 %v1211, %v1210
        %1228 = vst [vmem:[%s382] sm:$0xff] %v1212
        %1229 = vst [vmem:[%s382 + $0x8] sm:$0xff] %v1213
        %1230 = vst [vmem:[%s382 + $0x10] sm:$0xff] %v1214
        %1231 = vst [vmem:[%s382 + $0x18] sm:$0xff] %v1215
        %1232 = vst [vmem:[%s382 + $0x20] sm:$0xff] %v1216
        %1233 = vst [vmem:[%s382 + $0x28] sm:$0xff] %v1217
        %1234 = vst [vmem:[%s382 + $0x30] sm:$0xff] %v1218
        %1235 = vst [vmem:[%s382 + $0x38] sm:$0xff] %v1219
        %s1236 = sand.u32 %s253, 1
        %s1237 = scalar_lea.sflag [#allocation4], %s1236
        %s1238 = sand.u32 %s253, 1
        %s1239 = smul.addr %s1238, 64
        %s1240 = scalar_lea.vmem [#allocation5], %s1239
        // Predicated region
        $region65: #{tpu_custom_call.1} parent=59 // pred_check
          %p1241 = pneg %p263
        $region66: #{tpu_custom_call.1} parent=59 // pred_check_branch
          %1243 = sbr.rel (%p1241) target = $region68
        $region67: #{tpu_custom_call.1} parent=59 // pred_region
          %s1245 = ssub.s32 1024, 1024
          %1246 = vsyncadd %s1237, %s1245
          %s1247 = smul.addr %s25, 16
          %s1248 = smul.addr %s1247, 64
          %s1249 = scalar_lea.hbm %s10, %s1248
          %s1250 = sshll.u32 %s1240, 4
          %s1251 = int_to_ptr.vmem [resolvable:$true] %s1250
          %1256 = dma.vmem_to_hbm [thread:$0]  %s1251, 1024, %s1249, %s1237, 128, 128, 8
        $region68: #{tpu_custom_call.1} parent=59 // pred_fallthru
          _
      $region60: #{tpu_custom_call.1} parent=5 // pred_fallthru
        _
      %p1257 = scmp.le.s32.totalorder 2, %s20
      // Predicated region
      $region69: #{tpu_custom_call.1} parent=5 // pred_check
        %p1258 = pneg %p1257
      $region70: #{tpu_custom_call.1} parent=5 // pred_check_branch
        %1260 = sbr.rel (%p1258) target = $region72
      $region71: #{tpu_custom_call.1} parent=5 // pred_region
        %s1261 = ssub.s32 %s20, 2
        // Predicated region
        $region73: #{tpu_custom_call.1} parent=71 // pred_check
          %p1262 = pneg %p269
        $region74: #{tpu_custom_call.1} parent=71 // pred_check_branch
          %1264 = sbr.rel (%p1262) target = $region76
        $region75: #{tpu_custom_call.1} parent=71 // pred_region
          %s1265 = sand.u32 %s254, 1
          %s1266 = scalar_lea.sflag [#allocation4], %s1265
          %s1267 = sand.u32 %s254, 1
          %s1268 = smul.addr %s1267, 64
          %s1269 = scalar_lea.vmem [#allocation5], %s1268
          %1270 = dma.done %s1266, 1024
        $region76: #{tpu_custom_call.1} parent=71 // pred_fallthru
          _
      $region72: #{tpu_custom_call.1} parent=5 // pred_fallthru
        _
    $region6: #{tpu_custom_call.1} parent=1 // loop_footer
      %s24 = sadd.s32 1, %s20
    $region7: #{tpu_custom_call.1} parent=1 // loop_footer_branch
      %19 = sbr.rel target = $region3
    $region8: #{tpu_custom_call.1} parent=1 // loop_exit
      _
    %1271 = vsyncpa [#allocation3], 1
    %s1272 = scalar_lea.sflag [#allocation3], 1
    %1273 = vsyncpa %s1272, 1
    %1274 = vsyncpa [#allocation4], 1
    %s1275 = scalar_lea.sflag [#allocation4], 1
    %1276 = vsyncpa %s1275, 1

</llo_original>
